<compile_context>
chip_gen: v6e
topology: v6e:2x2x1
jax: 0.10.0
libtpu: 0.0.40
codegen_flags: <defaults>
</compile_context>

<pallas_src>
import functools
import math

import numpy as np
import jax
import jax.numpy as jnp
from jax import lax
from jax.experimental import pallas as pl
from jax.experimental.pallas import tpu as pltpu


# ----------------------------- in-kernel helpers -----------------------------

def _erf(x):
    # Abramowitz & Stegun 7.1.26, |err| < 1.5e-7, built only from ops with guaranteed
    # Mosaic lowerings (exp / abs / where / mul / add).
    p = 0.3275911
    a1, a2, a3, a4, a5 = 0.254829592, -0.284496736, 1.421413741, -1.453152027, 1.061405429
    s = jnp.where(x >= 0.0, 1.0, -1.0)
    ax = jnp.abs(x)
    t = 1.0 / (1.0 + p * ax)
    poly = ((((a5 * t + a4) * t + a3) * t + a2) * t + a1) * t
    return s * (1.0 - poly * jnp.exp(-ax * ax))


def _gelu_exact(x):
    # torch.nn.functional.gelu (approximate='none'), as used by Falcon's MLP.
    return 0.5 * x * (1.0 + _erf(x * 0.7071067811865476))


def _layernorm(x, g, b, eps=1e-5):
    mu = jnp.mean(x, axis=-1, keepdims=True)
    var = jnp.mean(jnp.square(x - mu), axis=-1, keepdims=True)
    return (x - mu) * lax.rsqrt(var + eps) * g + b


# --------------------------------- the kernel --------------------------------

def _falcon_layer_kernel(
    x_ref,                   # (Bt, S, IN)  f32
    wproj_ref,               # (IN, W)      bf16
    ln1g_ref, ln1b_ref,      # (1, W)       f32   ln_attn
    ln2g_ref, ln2b_ref,      # (1, W)       f32   ln_mlp
    wqkv_ref,                # (W, 3W)      bf16  de-interleaved [Wq | Wk | Wv]
    wdense_ref,              # (W, W)       bf16
    wfc_ref,                 # (W, FFN)     bf16
    wout_ref,                # (FFN, W)     bf16
    o_ref,                   # (Bt, S, W)   f32
    *, num_heads, head_dim, slopes, bt, seq_len,
):
    f32, bf16 = jnp.float32, jnp.bfloat16
    S = seq_len
    W = num_heads * head_dim
    rows = bt * S

    x = x_ref[...].astype(f32).reshape(rows, -1)                    # (rows, IN)

    # ---- SineProjection(inputs, width, axis=-1, scale=1, preserve_zeros=True) ----
    proj = jnp.dot(x.astype(bf16), wproj_ref[...], preferred_element_type=f32)
    nonzero = (jnp.max(jnp.abs(x), axis=-1, keepdims=True) > 0.0).astype(f32)
    h = jnp.sin(proj) * nonzero                                     # (rows, W)

    # ---- parallel LayerNorms (new_decoder_architecture) ----
    attn_ln = _layernorm(h, ln1g_ref[...], ln1b_ref[...])
    mlp_ln = _layernorm(h, ln2g_ref[...], ln2b_ref[...])

    # ---- fused QKV: one (rows, W) @ (W, 3W) matmul ----
    qkv = jnp.dot(attn_ln.astype(bf16), wqkv_ref[...], preferred_element_type=f32)
    q = qkv[:, 0 * W:1 * W].reshape(bt, S, W)
    k = qkv[:, 1 * W:2 * W].reshape(bt, S, W)
    v = qkv[:, 2 * W:3 * W].reshape(bt, S, W)

    # ---- in-kernel causal mask + alibi position bias (no HBM traffic) ----
    row_id = lax.broadcasted_iota(jnp.int32, (S, S), 0)
    col_id = lax.broadcasted_iota(jnp.int32, (S, S), 1)
    neg = jnp.finfo(f32).min
    causal = jnp.where(col_id <= row_id, 0.0, neg)[None, :, :]      # (1, S, S)
    pos = lax.broadcasted_iota(jnp.int32, (1, 1, S), 2).astype(f32)  # (1, 1, S)

    inv_norm = 1.0 / math.sqrt(head_dim)

    # Attention: static loop over heads, batched over Bt within each head.
    ctx_heads = []
    for hd in range(num_heads):
        lo = hd * head_dim
        qh = q[:, :, lo:lo + head_dim].astype(bf16)                 # (Bt, S, d)
        kh = k[:, :, lo:lo + head_dim].astype(bf16)
        vh = v[:, :, lo:lo + head_dim].astype(bf16)
        scores = jnp.einsum('bqd,bkd->bqk', qh, kh,
                            preferred_element_type=f32)             # (Bt, S, S)
        # eager Falcon: softmax((scores + alibi) * inv_norm_factor + attention_mask)
        logits = (scores + slopes[hd] * pos) * inv_norm + causal
        m = jnp.max(logits, axis=-1, keepdims=True)
        p = jnp.exp(logits - m)
        p = p * pl.reciprocal(jnp.sum(p, axis=-1, keepdims=True), approx=True)
        ctx_heads.append(jnp.einsum('bqk,bkd->bqd', p.astype(bf16), vh,
                                    preferred_element_type=f32))    # (Bt, S, d)

    # merge heads once, then a single full-contraction dense matmul
    ctx = jnp.concatenate(ctx_heads, axis=-1).reshape(rows, W)
    attn_out = jnp.dot(ctx.astype(bf16), wdense_ref[...], preferred_element_type=f32)

    # ---- FalconMLP: dense_h_to_4h -> gelu -> dense_4h_to_h ----
    h1 = jnp.dot(mlp_ln.astype(bf16), wfc_ref[...], preferred_element_type=f32)
    mlp_out = jnp.dot(_gelu_exact(h1).astype(bf16), wout_ref[...],
                      preferred_element_type=f32)

    # new_decoder_architecture: mlp_output += attention_output; output = mlp_output + residual
    out = mlp_out + attn_out + h
    o_ref[...] = out.reshape(bt, S, W).astype(o_ref.dtype)


# ------------------------------- JAX glue / wrapper ---------------------------

def _alibi_slopes(num_heads):
    # transformers.models.falcon.modeling_falcon.build_alibi_tensor slopes
    closest = 2 ** math.floor(math.log2(num_heads))
    base = 2.0 ** (-(2.0 ** -(math.log2(closest) - 3)))
    powers = np.arange(1, 1 + closest, dtype=np.float64)
    slopes = np.power(base, powers)
    if closest != num_heads:
        extra_base = 2.0 ** (-(2.0 ** -(math.log2(2 * closest) - 3)))
        num_rem = min(closest, num_heads - closest)
        extra_powers = np.arange(1, 1 + 2 * num_rem, 2, dtype=np.float64)
        slopes = np.concatenate([slopes, np.power(extra_base, extra_powers)])
    # HF casts slopes through bfloat16 before multiplying by positions
    return jnp.asarray(slopes, jnp.float32).astype(jnp.bfloat16).astype(jnp.float32)


def cached_embedding_forward(x, params, *, num_heads):
    B, S, IN = x.shape
    W = params["w_qkv"].shape[0]
    FFN = params["w_fc"].shape[1]
    head_dim = W // num_heads

    # Process as many batch elements per grid step as possible (target ~256 MXU rows),
    # keeping Bt a divisor of B so tiling stays exact.
    row_target = max(1, 256 // max(S, 1))
    bt = 1
    for d in range(1, min(B, row_target) + 1):
        if B % d == 0:
            bt = d

    # alibi with arch_mask=False depends only on (head, position): bias[h, j] = slope_h * j.
    # The slopes are static, so bake them into the kernel as constants.
    slopes = tuple(float(v) for v in np.asarray(_alibi_slopes(num_heads)))

    # bf16 matmul operands (f32 accumulation stays inside the kernel).
    bf16 = jnp.bfloat16
    wproj = params["w_proj"].astype(bf16)
    wqkv = params["w_qkv"].astype(bf16)
    wdense = params["w_dense"].astype(bf16)
    wfc = params["w_fc"].astype(bf16)
    wout = params["w_out"].astype(bf16)

    kernel = functools.partial(
        _falcon_layer_kernel,
        num_heads=num_heads, head_dim=head_dim, slopes=slopes, bt=bt, seq_len=S)

    def const_spec(shape):
        return pl.BlockSpec(shape, lambda b, _n=len(shape): (0,) * _n)

    in_specs = [
        pl.BlockSpec((bt, S, IN), lambda b: (b, 0, 0)),              # x
        const_spec((IN, W)),                                         # SineProjection weight
        const_spec((1, W)), const_spec((1, W)),                      # ln_attn γ, β
        const_spec((1, W)), const_spec((1, W)),                      # ln_mlp γ, β
        const_spec((W, 3 * W)),                                      # fused Wq|Wk|Wv
        const_spec((W, W)),                                          # attention dense
        const_spec((W, FFN)), const_spec((FFN, W)),                  # MLP
    ]
    out_specs = pl.BlockSpec((bt, S, W), lambda b: (b, 0, 0))

    return pl.pallas_call(
        kernel,
        grid=(B // bt,),
        in_specs=in_specs,
        out_specs=out_specs,
        out_shape=jax.ShapeDtypeStruct((B, S, W), jnp.float32),
        compiler_params=pltpu.CompilerParams(dimension_semantics=("parallel",)),
    )(
        x, wproj,
        params["ln1_g"], params["ln1_b"], params["ln2_g"], params["ln2_b"],
        wqkv, wdense, wfc, wout,
    )


def init_params(key, inputs, width, ffn, num_heads):
    """Deterministic synthetic parameters matching the module's shapes (no bias,
    per FalconConfig(bias=False); LayerNorms at torch default init)."""
    ks = jax.random.split(key, 5)

    def lin(k, i, o):
        return jax.random.normal(k, (i, o), jnp.float32) * 0.02

    head_dim = width // num_heads
    w_proj = lin(ks[0], inputs, width)
    # Falcon fused query_key_value with new_decoder_architecture & num_kv==num_heads:
    # output columns are interleaved per head as [q_h, k_h, v_h]; de-interleave here
    # and store as a single column-concatenated [Wq | Wk | Wv] weight.
    w_qkv_raw = lin(ks[1], width, 3 * width).reshape(width, num_heads, 3, head_dim)
    wq = w_qkv_raw[:, :, 0, :].reshape(width, width)
    wk = w_qkv_raw[:, :, 1, :].reshape(width, width)
    wv = w_qkv_raw[:, :, 2, :].reshape(width, width)
    w_qkv = jnp.concatenate([wq, wk, wv], axis=1)                    # (W, 3W)
    return dict(
        w_proj=w_proj,
        ln1_g=jnp.ones((1, width), jnp.float32), ln1_b=jnp.zeros((1, width), jnp.float32),
        ln2_g=jnp.ones((1, width), jnp.float32), ln2_b=jnp.zeros((1, width), jnp.float32),
        w_qkv=w_qkv,
        w_dense=lin(ks[2], width, width),
        w_fc=lin(ks[3], width, ffn),
        w_out=lin(ks[4], ffn, width),
    )


if __name__ == "__main__":
    # Small shapes consistent with the module: inputs=16 -> arch_width=32,
    # arch_head=4, single FalconDecoderLayer, ffn_hidden_size == arch_width.
    B, S, IN = 2, 8, 16
    WIDTH, HEADS, FFN = 32, 4, 32

    key = jax.random.PRNGKey(0)
    kx, kp = jax.random.split(key)
    x = jax.random.normal(kx, (B, S, IN), jnp.float32)
    # zero-pad the tail of the second sequence (exercises SineProjection preserve_zeros)
    valid = jnp.arange(S)[None, :, None] < jnp.array([S, S - 2])[:, None, None]
    x = x * valid.astype(jnp.float32)

    params = init_params(kp, IN, WIDTH, FFN, HEADS)
    y = cached_embedding_forward(x, params, num_heads=HEADS)
    jax.block_until_ready(y)
    assert y.shape == (B, S, WIDTH) and y.dtype == jnp.float32
    assert bool(jnp.all(jnp.isfinite(y)))
    print("KERNEL_OK")
</pallas_src>

<mosaic_0001>
module attributes {stable_mosaic.version = 11 : i64} {
  func.func @_falcon_layer_kernel(%arg0: i32, %arg1: memref<2x8x16xf32, #tpu.memory_space<vmem>>, %arg2: memref<16x32xbf16, #tpu.memory_space<vmem>>, %arg3: memref<1x32xf32, #tpu.memory_space<vmem>>, %arg4: memref<1x32xf32, #tpu.memory_space<vmem>>, %arg5: memref<1x32xf32, #tpu.memory_space<vmem>>, %arg6: memref<1x32xf32, #tpu.memory_space<vmem>>, %arg7: memref<32x96xbf16, #tpu.memory_space<vmem>>, %arg8: memref<32x32xbf16, #tpu.memory_space<vmem>>, %arg9: memref<32x32xbf16, #tpu.memory_space<vmem>>, %arg10: memref<32x32xbf16, #tpu.memory_space<vmem>>, %arg11: memref<2x8x32xf32, #tpu.memory_space<vmem>>) attributes {dimension_semantics = [#tpu.dimension_semantics<parallel>], iteration_bounds = array<i64: 1>, scalar_prefetch = 0 : i64, scratch_operands = 0 : i64, tpu.core_type = #tpu.core_type<tc>, window_params = [{transform_indices = @transform_0, window_bounds = array<i64: 2, 8, 16>}, {pipeline_mode = #tpu.pipeline_mode<synchronous>, transform_indices = @transform_1, window_bounds = array<i64: 16, 32>}, {pipeline_mode = #tpu.pipeline_mode<synchronous>, transform_indices = @transform_2, window_bounds = array<i64: 1, 32>}, {pipeline_mode = #tpu.pipeline_mode<synchronous>, transform_indices = @transform_3, window_bounds = array<i64: 1, 32>}, {pipeline_mode = #tpu.pipeline_mode<synchronous>, transform_indices = @transform_4, window_bounds = array<i64: 1, 32>}, {pipeline_mode = #tpu.pipeline_mode<synchronous>, transform_indices = @transform_5, window_bounds = array<i64: 1, 32>}, {pipeline_mode = #tpu.pipeline_mode<synchronous>, transform_indices = @transform_6, window_bounds = array<i64: 32, 96>}, {pipeline_mode = #tpu.pipeline_mode<synchronous>, transform_indices = @transform_7, window_bounds = array<i64: 32, 32>}, {pipeline_mode = #tpu.pipeline_mode<synchronous>, transform_indices = @transform_8, window_bounds = array<i64: 32, 32>}, {pipeline_mode = #tpu.pipeline_mode<synchronous>, transform_indices = @transform_9, window_bounds = array<i64: 32, 32>}, {transform_indices = @transform_10, window_bounds = array<i64: 2, 8, 32>}]} {
    %c0 = arith.constant 0 : index
    %c0_0 = arith.constant 0 : index
    %c0_1 = arith.constant 0 : index
    %0 = vector.load %arg1[%c0, %c0_0, %c0_1] : memref<2x8x16xf32, #tpu.memory_space<vmem>>, vector<2x8x16xf32>
    %1 = vector.shape_cast %0 : vector<2x8x16xf32> to vector<16x16xf32>
    %2 = arith.truncf %1 : vector<16x16xf32> to vector<16x16xbf16>
    %c0_2 = arith.constant 0 : index
    %c0_3 = arith.constant 0 : index
    %3 = vector.load %arg2[%c0_2, %c0_3] : memref<16x32xbf16, #tpu.memory_space<vmem>>, vector<16x32xbf16>
    %cst = arith.constant dense<0.000000e+00> : vector<16x32xf32>
    %4 = tpu.matmul %2, %3, %cst {dimension_numbers = #tpu.dot_dimension_numbers<[1], [0], [0], [1], [0, 0, 1, 1], [], []>} : vector<16x16xbf16>, vector<16x32xbf16>, vector<16x32xf32> -> vector<16x32xf32>
    %5 = math.absf %1 : vector<16x16xf32>
    %cst_4 = arith.constant dense<0xFF800000> : vector<16xf32>
    %6 = vector.multi_reduction <maximumf>, %5, %cst_4 [1] : vector<16x16xf32> to vector<16xf32>
    %7 = vector.shape_cast %6 : vector<16xf32> to vector<16x1xf32>
    %cst_5 = arith.constant 0.000000e+00 : f32
    %8 = vector.broadcast %cst_5 : f32 to vector<16x1xf32>
    %9 = arith.cmpf ogt, %7, %8 : vector<16x1xf32>
    %10 = arith.extui %9 : vector<16x1xi1> to vector<16x1xi32>
    %11 = arith.sitofp %10 : vector<16x1xi32> to vector<16x1xf32>
    %12 = math.sin %4 : vector<16x32xf32>
    %13 = vector.broadcast %11 : vector<16x1xf32> to vector<16x32xf32>
    %14 = arith.mulf %12, %13 : vector<16x32xf32>
    %c0_6 = arith.constant 0 : index
    %c0_7 = arith.constant 0 : index
    %15 = vector.load %arg3[%c0_6, %c0_7] : memref<1x32xf32, #tpu.memory_space<vmem>>, vector<1x32xf32>
    %c0_8 = arith.constant 0 : index
    %c0_9 = arith.constant 0 : index
    %16 = vector.load %arg4[%c0_8, %c0_9] : memref<1x32xf32, #tpu.memory_space<vmem>>, vector<1x32xf32>
    %cst_10 = arith.constant dense<0.000000e+00> : vector<16xf32>
    %17 = vector.multi_reduction <add>, %14, %cst_10 [1] : vector<16x32xf32> to vector<16xf32>
    %18 = vector.shape_cast %17 : vector<16xf32> to vector<16x1xf32>
    %cst_11 = arith.constant 3.200000e+01 : f32
    %19 = vector.broadcast %cst_11 : f32 to vector<16x1xf32>
    %20 = arith.divf %18, %19 : vector<16x1xf32>
    %21 = vector.broadcast %20 : vector<16x1xf32> to vector<16x32xf32>
    %22 = arith.subf %14, %21 : vector<16x32xf32>
    %23 = arith.mulf %22, %22 : vector<16x32xf32>
    %cst_12 = arith.constant dense<0.000000e+00> : vector<16xf32>
    %24 = vector.multi_reduction <add>, %23, %cst_12 [1] : vector<16x32xf32> to vector<16xf32>
    %25 = vector.shape_cast %24 : vector<16xf32> to vector<16x1xf32>
    %cst_13 = arith.constant 3.200000e+01 : f32
    %26 = vector.broadcast %cst_13 : f32 to vector<16x1xf32>
    %27 = arith.divf %25, %26 : vector<16x1xf32>
    %28 = vector.broadcast %20 : vector<16x1xf32> to vector<16x32xf32>
    %29 = arith.subf %14, %28 : vector<16x32xf32>
    %cst_14 = arith.constant 9.99999974E-6 : f32
    %30 = vector.broadcast %cst_14 : f32 to vector<16x1xf32>
    %31 = arith.addf %27, %30 : vector<16x1xf32>
    %32 = math.rsqrt %31 : vector<16x1xf32>
    %33 = vector.broadcast %32 : vector<16x1xf32> to vector<16x32xf32>
    %34 = arith.mulf %29, %33 : vector<16x32xf32>
    %35 = vector.broadcast %15 : vector<1x32xf32> to vector<16x32xf32>
    %36 = arith.mulf %34, %35 : vector<16x32xf32>
    %37 = vector.broadcast %16 : vector<1x32xf32> to vector<16x32xf32>
    %38 = arith.addf %36, %37 : vector<16x32xf32>
    %c0_15 = arith.constant 0 : index
    %c0_16 = arith.constant 0 : index
    %39 = vector.load %arg5[%c0_15, %c0_16] : memref<1x32xf32, #tpu.memory_space<vmem>>, vector<1x32xf32>
    %c0_17 = arith.constant 0 : index
    %c0_18 = arith.constant 0 : index
    %40 = vector.load %arg6[%c0_17, %c0_18] : memref<1x32xf32, #tpu.memory_space<vmem>>, vector<1x32xf32>
    %cst_19 = arith.constant dense<0.000000e+00> : vector<16xf32>
    %41 = vector.multi_reduction <add>, %14, %cst_19 [1] : vector<16x32xf32> to vector<16xf32>
    %42 = vector.shape_cast %41 : vector<16xf32> to vector<16x1xf32>
    %cst_20 = arith.constant 3.200000e+01 : f32
    %43 = vector.broadcast %cst_20 : f32 to vector<16x1xf32>
    %44 = arith.divf %42, %43 : vector<16x1xf32>
    %45 = vector.broadcast %44 : vector<16x1xf32> to vector<16x32xf32>
    %46 = arith.subf %14, %45 : vector<16x32xf32>
    %47 = arith.mulf %46, %46 : vector<16x32xf32>
    %cst_21 = arith.constant dense<0.000000e+00> : vector<16xf32>
    %48 = vector.multi_reduction <add>, %47, %cst_21 [1] : vector<16x32xf32> to vector<16xf32>
    %49 = vector.shape_cast %48 : vector<16xf32> to vector<16x1xf32>
    %cst_22 = arith.constant 3.200000e+01 : f32
    %50 = vector.broadcast %cst_22 : f32 to vector<16x1xf32>
    %51 = arith.divf %49, %50 : vector<16x1xf32>
    %52 = vector.broadcast %44 : vector<16x1xf32> to vector<16x32xf32>
    %53 = arith.subf %14, %52 : vector<16x32xf32>
    %cst_23 = arith.constant 9.99999974E-6 : f32
    %54 = vector.broadcast %cst_23 : f32 to vector<16x1xf32>
    %55 = arith.addf %51, %54 : vector<16x1xf32>
    %56 = math.rsqrt %55 : vector<16x1xf32>
    %57 = vector.broadcast %56 : vector<16x1xf32> to vector<16x32xf32>
    %58 = arith.mulf %53, %57 : vector<16x32xf32>
    %59 = vector.broadcast %39 : vector<1x32xf32> to vector<16x32xf32>
    %60 = arith.mulf %58, %59 : vector<16x32xf32>
    %61 = vector.broadcast %40 : vector<1x32xf32> to vector<16x32xf32>
    %62 = arith.addf %60, %61 : vector<16x32xf32>
    %63 = arith.truncf %38 : vector<16x32xf32> to vector<16x32xbf16>
    %c0_24 = arith.constant 0 : index
    %c0_25 = arith.constant 0 : index
    %64 = vector.load %arg7[%c0_24, %c0_25] : memref<32x96xbf16, #tpu.memory_space<vmem>>, vector<32x96xbf16>
    %cst_26 = arith.constant dense<0.000000e+00> : vector<16x96xf32>
    %65 = tpu.matmul %63, %64, %cst_26 {dimension_numbers = #tpu.dot_dimension_numbers<[1], [0], [0], [1], [0, 0, 1, 1], [], []>} : vector<16x32xbf16>, vector<32x96xbf16>, vector<16x96xf32> -> vector<16x96xf32>
    %66 = vector.extract_strided_slice %65 {offsets = [0, 0], sizes = [16, 32], strides = [1, 1]} : vector<16x96xf32> to vector<16x32xf32>
    %67 = vector.shape_cast %66 : vector<16x32xf32> to vector<2x8x32xf32>
    %68 = vector.extract_strided_slice %65 {offsets = [0, 32], sizes = [16, 32], strides = [1, 1]} : vector<16x96xf32> to vector<16x32xf32>
    %69 = vector.shape_cast %68 : vector<16x32xf32> to vector<2x8x32xf32>
    %70 = vector.extract_strided_slice %65 {offsets = [0, 64], sizes = [16, 32], strides = [1, 1]} : vector<16x96xf32> to vector<16x32xf32>
    %71 = vector.shape_cast %70 : vector<16x32xf32> to vector<2x8x32xf32>
    %72 = tpu.iota {dimensions = array<i32: 0>} : vector<8x8xi32>
    %73 = tpu.iota {dimensions = array<i32: 1>} : vector<8x8xi32>
    %74 = arith.cmpi sle, %73, %72 : vector<8x8xi32>
    %cst_27 = arith.constant 0.000000e+00 : f32
    %cst_28 = arith.constant -3.40282347E+38 : f32
    %75 = vector.broadcast %cst_27 : f32 to vector<8x8xf32>
    %76 = vector.broadcast %cst_28 : f32 to vector<8x8xf32>
    %77 = arith.select %74, %75, %76 : vector<8x8xi1>, vector<8x8xf32>
    %78 = vector.shape_cast %77 : vector<8x8xf32> to vector<1x8x8xf32>
    %79 = tpu.iota {dimensions = array<i32: 2>} : vector<1x1x8xi32>
    %80 = arith.sitofp %79 : vector<1x1x8xi32> to vector<1x1x8xf32>
    %81 = vector.extract_strided_slice %67 {offsets = [0, 0, 0], sizes = [2, 8, 8], strides = [1, 1, 1]} : vector<2x8x32xf32> to vector<2x8x8xf32>
    %82 = arith.truncf %81 : vector<2x8x8xf32> to vector<2x8x8xbf16>
    %83 = vector.extract_strided_slice %69 {offsets = [0, 0, 0], sizes = [2, 8, 8], strides = [1, 1, 1]} : vector<2x8x32xf32> to vector<2x8x8xf32>
    %84 = arith.truncf %83 : vector<2x8x8xf32> to vector<2x8x8xbf16>
    %85 = vector.extract_strided_slice %71 {offsets = [0, 0, 0], sizes = [2, 8, 8], strides = [1, 1, 1]} : vector<2x8x32xf32> to vector<2x8x8xf32>
    %86 = arith.truncf %85 : vector<2x8x8xf32> to vector<2x8x8xbf16>
    "tpu.trace_start"() <{level = 10 : i32, message = "bqd,bkd->bqk"}> : () -> ()
    %cst_29 = arith.constant dense<0.000000e+00> : vector<2x8x8xf32>
    %87 = tpu.matmul %82, %84, %cst_29 {dimension_numbers = #tpu.dot_dimension_numbers<[2], [2], [1], [1], [0, 0, 0, 1, 1, 1], [0], [0]>} : vector<2x8x8xbf16>, vector<2x8x8xbf16>, vector<2x8x8xf32> -> vector<2x8x8xf32>
    "tpu.trace_stop"() : () -> ()
    %cst_30 = arith.constant 2.500000e-01 : f32
    %88 = vector.broadcast %cst_30 : f32 to vector<1x1x8xf32>
    %89 = arith.mulf %88, %80 : vector<1x1x8xf32>
    %90 = vector.broadcast %89 : vector<1x1x8xf32> to vector<2x8x8xf32>
    %91 = arith.addf %87, %90 : vector<2x8x8xf32>
    %cst_31 = arith.constant 0.353553385 : f32
    %92 = vector.broadcast %cst_31 : f32 to vector<2x8x8xf32>
    %93 = arith.mulf %91, %92 : vector<2x8x8xf32>
    %94 = vector.broadcast %78 : vector<1x8x8xf32> to vector<2x8x8xf32>
    %95 = arith.addf %93, %94 : vector<2x8x8xf32>
    %cst_32 = arith.constant dense<0xFF800000> : vector<2x8xf32>
    %96 = vector.multi_reduction <maximumf>, %95, %cst_32 [2] : vector<2x8x8xf32> to vector<2x8xf32>
    %97 = vector.shape_cast %96 : vector<2x8xf32> to vector<2x8x1xf32>
    %98 = vector.broadcast %97 : vector<2x8x1xf32> to vector<2x8x8xf32>
    %99 = arith.subf %95, %98 : vector<2x8x8xf32>
    %100 = math.exp %99 : vector<2x8x8xf32>
    %cst_33 = arith.constant dense<0.000000e+00> : vector<2x8xf32>
    %101 = vector.multi_reduction <add>, %100, %cst_33 [2] : vector<2x8x8xf32> to vector<2x8xf32>
    %102 = vector.shape_cast %101 : vector<2x8xf32> to vector<2x8x1xf32>
    %103 = tpu.reciprocal %102 {approx = true} : vector<2x8x1xf32> -> vector<2x8x1xf32>
    %104 = vector.broadcast %103 : vector<2x8x1xf32> to vector<2x8x8xf32>
    %105 = arith.mulf %100, %104 : vector<2x8x8xf32>
    %106 = arith.truncf %105 : vector<2x8x8xf32> to vector<2x8x8xbf16>
    "tpu.trace_start"() <{level = 10 : i32, message = "bqk,bkd->bqd"}> : () -> ()
    %cst_34 = arith.constant dense<0.000000e+00> : vector<2x8x8xf32>
    %107 = tpu.matmul %106, %86, %cst_34 {dimension_numbers = #tpu.dot_dimension_numbers<[2], [1], [1], [2], [0, 0, 0, 1, 1, 2], [0], [0]>} : vector<2x8x8xbf16>, vector<2x8x8xbf16>, vector<2x8x8xf32> -> vector<2x8x8xf32>
    "tpu.trace_stop"() : () -> ()
    %108 = vector.extract_strided_slice %67 {offsets = [0, 0, 8], sizes = [2, 8, 8], strides = [1, 1, 1]} : vector<2x8x32xf32> to vector<2x8x8xf32>
    %109 = arith.truncf %108 : vector<2x8x8xf32> to vector<2x8x8xbf16>
    %110 = vector.extract_strided_slice %69 {offsets = [0, 0, 8], sizes = [2, 8, 8], strides = [1, 1, 1]} : vector<2x8x32xf32> to vector<2x8x8xf32>
    %111 = arith.truncf %110 : vector<2x8x8xf32> to vector<2x8x8xbf16>
    %112 = vector.extract_strided_slice %71 {offsets = [0, 0, 8], sizes = [2, 8, 8], strides = [1, 1, 1]} : vector<2x8x32xf32> to vector<2x8x8xf32>
    %113 = arith.truncf %112 : vector<2x8x8xf32> to vector<2x8x8xbf16>
    "tpu.trace_start"() <{level = 10 : i32, message = "bqd,bkd->bqk"}> : () -> ()
    %cst_35 = arith.constant dense<0.000000e+00> : vector<2x8x8xf32>
    %114 = tpu.matmul %109, %111, %cst_35 {dimension_numbers = #tpu.dot_dimension_numbers<[2], [2], [1], [1], [0, 0, 0, 1, 1, 1], [0], [0]>} : vector<2x8x8xbf16>, vector<2x8x8xbf16>, vector<2x8x8xf32> -> vector<2x8x8xf32>
    "tpu.trace_stop"() : () -> ()
    %cst_36 = arith.constant 6.250000e-02 : f32
    %115 = vector.broadcast %cst_36 : f32 to vector<1x1x8xf32>
    %116 = arith.mulf %115, %80 : vector<1x1x8xf32>
    %117 = vector.broadcast %116 : vector<1x1x8xf32> to vector<2x8x8xf32>
    %118 = arith.addf %114, %117 : vector<2x8x8xf32>
    %cst_37 = arith.constant 0.353553385 : f32
    %119 = vector.broadcast %cst_37 : f32 to vector<2x8x8xf32>
    %120 = arith.mulf %118, %119 : vector<2x8x8xf32>
    %121 = vector.broadcast %78 : vector<1x8x8xf32> to vector<2x8x8xf32>
    %122 = arith.addf %120, %121 : vector<2x8x8xf32>
    %cst_38 = arith.constant dense<0xFF800000> : vector<2x8xf32>
    %123 = vector.multi_reduction <maximumf>, %122, %cst_38 [2] : vector<2x8x8xf32> to vector<2x8xf32>
    %124 = vector.shape_cast %123 : vector<2x8xf32> to vector<2x8x1xf32>
    %125 = vector.broadcast %124 : vector<2x8x1xf32> to vector<2x8x8xf32>
    %126 = arith.subf %122, %125 : vector<2x8x8xf32>
    %127 = math.exp %126 : vector<2x8x8xf32>
    %cst_39 = arith.constant dense<0.000000e+00> : vector<2x8xf32>
    %128 = vector.multi_reduction <add>, %127, %cst_39 [2] : vector<2x8x8xf32> to vector<2x8xf32>
    %129 = vector.shape_cast %128 : vector<2x8xf32> to vector<2x8x1xf32>
    %130 = tpu.reciprocal %129 {approx = true} : vector<2x8x1xf32> -> vector<2x8x1xf32>
    %131 = vector.broadcast %130 : vector<2x8x1xf32> to vector<2x8x8xf32>
    %132 = arith.mulf %127, %131 : vector<2x8x8xf32>
    %133 = arith.truncf %132 : vector<2x8x8xf32> to vector<2x8x8xbf16>
    "tpu.trace_start"() <{level = 10 : i32, message = "bqk,bkd->bqd"}> : () -> ()
    %cst_40 = arith.constant dense<0.000000e+00> : vector<2x8x8xf32>
    %134 = tpu.matmul %133, %113, %cst_40 {dimension_numbers = #tpu.dot_dimension_numbers<[2], [1], [1], [2], [0, 0, 0, 1, 1, 2], [0], [0]>} : vector<2x8x8xbf16>, vector<2x8x8xbf16>, vector<2x8x8xf32> -> vector<2x8x8xf32>
    "tpu.trace_stop"() : () -> ()
    %135 = vector.extract_strided_slice %67 {offsets = [0, 0, 16], sizes = [2, 8, 8], strides = [1, 1, 1]} : vector<2x8x32xf32> to vector<2x8x8xf32>
    %136 = arith.truncf %135 : vector<2x8x8xf32> to vector<2x8x8xbf16>
    %137 = vector.extract_strided_slice %69 {offsets = [0, 0, 16], sizes = [2, 8, 8], strides = [1, 1, 1]} : vector<2x8x32xf32> to vector<2x8x8xf32>
    %138 = arith.truncf %137 : vector<2x8x8xf32> to vector<2x8x8xbf16>
    %139 = vector.extract_strided_slice %71 {offsets = [0, 0, 16], sizes = [2, 8, 8], strides = [1, 1, 1]} : vector<2x8x32xf32> to vector<2x8x8xf32>
    %140 = arith.truncf %139 : vector<2x8x8xf32> to vector<2x8x8xbf16>
    "tpu.trace_start"() <{level = 10 : i32, message = "bqd,bkd->bqk"}> : () -> ()
    %cst_41 = arith.constant dense<0.000000e+00> : vector<2x8x8xf32>
    %141 = tpu.matmul %136, %138, %cst_41 {dimension_numbers = #tpu.dot_dimension_numbers<[2], [2], [1], [1], [0, 0, 0, 1, 1, 1], [0], [0]>} : vector<2x8x8xbf16>, vector<2x8x8xbf16>, vector<2x8x8xf32> -> vector<2x8x8xf32>
    "tpu.trace_stop"() : () -> ()
    %cst_42 = arith.constant 1.562500e-02 : f32
    %142 = vector.broadcast %cst_42 : f32 to vector<1x1x8xf32>
    %143 = arith.mulf %142, %80 : vector<1x1x8xf32>
    %144 = vector.broadcast %143 : vector<1x1x8xf32> to vector<2x8x8xf32>
    %145 = arith.addf %141, %144 : vector<2x8x8xf32>
    %cst_43 = arith.constant 0.353553385 : f32
    %146 = vector.broadcast %cst_43 : f32 to vector<2x8x8xf32>
    %147 = arith.mulf %145, %146 : vector<2x8x8xf32>
    %148 = vector.broadcast %78 : vector<1x8x8xf32> to vector<2x8x8xf32>
    %149 = arith.addf %147, %148 : vector<2x8x8xf32>
    %cst_44 = arith.constant dense<0xFF800000> : vector<2x8xf32>
    %150 = vector.multi_reduction <maximumf>, %149, %cst_44 [2] : vector<2x8x8xf32> to vector<2x8xf32>
    %151 = vector.shape_cast %150 : vector<2x8xf32> to vector<2x8x1xf32>
    %152 = vector.broadcast %151 : vector<2x8x1xf32> to vector<2x8x8xf32>
    %153 = arith.subf %149, %152 : vector<2x8x8xf32>
    %154 = math.exp %153 : vector<2x8x8xf32>
    %cst_45 = arith.constant dense<0.000000e+00> : vector<2x8xf32>
    %155 = vector.multi_reduction <add>, %154, %cst_45 [2] : vector<2x8x8xf32> to vector<2x8xf32>
    %156 = vector.shape_cast %155 : vector<2x8xf32> to vector<2x8x1xf32>
    %157 = tpu.reciprocal %156 {approx = true} : vector<2x8x1xf32> -> vector<2x8x1xf32>
    %158 = vector.broadcast %157 : vector<2x8x1xf32> to vector<2x8x8xf32>
    %159 = arith.mulf %154, %158 : vector<2x8x8xf32>
    %160 = arith.truncf %159 : vector<2x8x8xf32> to vector<2x8x8xbf16>
    "tpu.trace_start"() <{level = 10 : i32, message = "bqk,bkd->bqd"}> : () -> ()
    %cst_46 = arith.constant dense<0.000000e+00> : vector<2x8x8xf32>
    %161 = tpu.matmul %160, %140, %cst_46 {dimension_numbers = #tpu.dot_dimension_numbers<[2], [1], [1], [2], [0, 0, 0, 1, 1, 2], [0], [0]>} : vector<2x8x8xbf16>, vector<2x8x8xbf16>, vector<2x8x8xf32> -> vector<2x8x8xf32>
    "tpu.trace_stop"() : () -> ()
    %162 = vector.extract_strided_slice %67 {offsets = [0, 0, 24], sizes = [2, 8, 8], strides = [1, 1, 1]} : vector<2x8x32xf32> to vector<2x8x8xf32>
    %163 = arith.truncf %162 : vector<2x8x8xf32> to vector<2x8x8xbf16>
    %164 = vector.extract_strided_slice %69 {offsets = [0, 0, 24], sizes = [2, 8, 8], strides = [1, 1, 1]} : vector<2x8x32xf32> to vector<2x8x8xf32>
    %165 = arith.truncf %164 : vector<2x8x8xf32> to vector<2x8x8xbf16>
    %166 = vector.extract_strided_slice %71 {offsets = [0, 0, 24], sizes = [2, 8, 8], strides = [1, 1, 1]} : vector<2x8x32xf32> to vector<2x8x8xf32>
    %167 = arith.truncf %166 : vector<2x8x8xf32> to vector<2x8x8xbf16>
    "tpu.trace_start"() <{level = 10 : i32, message = "bqd,bkd->bqk"}> : () -> ()
    %cst_47 = arith.constant dense<0.000000e+00> : vector<2x8x8xf32>
    %168 = tpu.matmul %163, %165, %cst_47 {dimension_numbers = #tpu.dot_dimension_numbers<[2], [2], [1], [1], [0, 0, 0, 1, 1, 1], [0], [0]>} : vector<2x8x8xbf16>, vector<2x8x8xbf16>, vector<2x8x8xf32> -> vector<2x8x8xf32>
    "tpu.trace_stop"() : () -> ()
    %cst_48 = arith.constant 3.906250e-03 : f32
    %169 = vector.broadcast %cst_48 : f32 to vector<1x1x8xf32>
    %170 = arith.mulf %169, %80 : vector<1x1x8xf32>
    %171 = vector.broadcast %170 : vector<1x1x8xf32> to vector<2x8x8xf32>
    %172 = arith.addf %168, %171 : vector<2x8x8xf32>
    %cst_49 = arith.constant 0.353553385 : f32
    %173 = vector.broadcast %cst_49 : f32 to vector<2x8x8xf32>
    %174 = arith.mulf %172, %173 : vector<2x8x8xf32>
    %175 = vector.broadcast %78 : vector<1x8x8xf32> to vector<2x8x8xf32>
    %176 = arith.addf %174, %175 : vector<2x8x8xf32>
    %cst_50 = arith.constant dense<0xFF800000> : vector<2x8xf32>
    %177 = vector.multi_reduction <maximumf>, %176, %cst_50 [2] : vector<2x8x8xf32> to vector<2x8xf32>
    %178 = vector.shape_cast %177 : vector<2x8xf32> to vector<2x8x1xf32>
    %179 = vector.broadcast %178 : vector<2x8x1xf32> to vector<2x8x8xf32>
    %180 = arith.subf %176, %179 : vector<2x8x8xf32>
    %181 = math.exp %180 : vector<2x8x8xf32>
    %cst_51 = arith.constant dense<0.000000e+00> : vector<2x8xf32>
    %182 = vector.multi_reduction <add>, %181, %cst_51 [2] : vector<2x8x8xf32> to vector<2x8xf32>
    %183 = vector.shape_cast %182 : vector<2x8xf32> to vector<2x8x1xf32>
    %184 = tpu.reciprocal %183 {approx = true} : vector<2x8x1xf32> -> vector<2x8x1xf32>
    %185 = vector.broadcast %184 : vector<2x8x1xf32> to vector<2x8x8xf32>
    %186 = arith.mulf %181, %185 : vector<2x8x8xf32>
    %187 = arith.truncf %186 : vector<2x8x8xf32> to vector<2x8x8xbf16>
    "tpu.trace_start"() <{level = 10 : i32, message = "bqk,bkd->bqd"}> : () -> ()
    %cst_52 = arith.constant dense<0.000000e+00> : vector<2x8x8xf32>
    %188 = tpu.matmul %187, %167, %cst_52 {dimension_numbers = #tpu.dot_dimension_numbers<[2], [1], [1], [2], [0, 0, 0, 1, 1, 2], [0], [0]>} : vector<2x8x8xbf16>, vector<2x8x8xbf16>, vector<2x8x8xf32> -> vector<2x8x8xf32>
    "tpu.trace_stop"() : () -> ()
    %189 = tpu.concatenate %107, %134, %161, %188 in 2 : vector<2x8x8xf32>, vector<2x8x8xf32>, vector<2x8x8xf32>, vector<2x8x8xf32> -> vector<2x8x32xf32>
    %190 = vector.shape_cast %189 : vector<2x8x32xf32> to vector<16x32xf32>
    %191 = arith.truncf %190 : vector<16x32xf32> to vector<16x32xbf16>
    %c0_53 = arith.constant 0 : index
    %c0_54 = arith.constant 0 : index
    %192 = vector.load %arg8[%c0_53, %c0_54] : memref<32x32xbf16, #tpu.memory_space<vmem>>, vector<32x32xbf16>
    %cst_55 = arith.constant dense<0.000000e+00> : vector<16x32xf32>
    %193 = tpu.matmul %191, %192, %cst_55 {dimension_numbers = #tpu.dot_dimension_numbers<[1], [0], [0], [1], [0, 0, 1, 1], [], []>} : vector<16x32xbf16>, vector<32x32xbf16>, vector<16x32xf32> -> vector<16x32xf32>
    %194 = arith.truncf %62 : vector<16x32xf32> to vector<16x32xbf16>
    %c0_56 = arith.constant 0 : index
    %c0_57 = arith.constant 0 : index
    %195 = vector.load %arg9[%c0_56, %c0_57] : memref<32x32xbf16, #tpu.memory_space<vmem>>, vector<32x32xbf16>
    %cst_58 = arith.constant dense<0.000000e+00> : vector<16x32xf32>
    %196 = tpu.matmul %194, %195, %cst_58 {dimension_numbers = #tpu.dot_dimension_numbers<[1], [0], [0], [1], [0, 0, 1, 1], [], []>} : vector<16x32xbf16>, vector<32x32xbf16>, vector<16x32xf32> -> vector<16x32xf32>
    %cst_59 = arith.constant 5.000000e-01 : f32
    %197 = vector.broadcast %cst_59 : f32 to vector<16x32xf32>
    %198 = arith.mulf %197, %196 : vector<16x32xf32>
    %cst_60 = arith.constant 0.707106769 : f32
    %199 = vector.broadcast %cst_60 : f32 to vector<16x32xf32>
    %200 = arith.mulf %196, %199 : vector<16x32xf32>
    %cst_61 = arith.constant 0.000000e+00 : f32
    %201 = vector.broadcast %cst_61 : f32 to vector<16x32xf32>
    %202 = arith.cmpf oge, %200, %201 : vector<16x32xf32>
    %cst_62 = arith.constant 1.000000e+00 : f32
    %cst_63 = arith.constant -1.000000e+00 : f32
    %203 = vector.broadcast %cst_62 : f32 to vector<16x32xf32>
    %204 = vector.broadcast %cst_63 : f32 to vector<16x32xf32>
    %205 = arith.select %202, %203, %204 : vector<16x32xi1>, vector<16x32xf32>
    %206 = math.absf %200 : vector<16x32xf32>
    %cst_64 = arith.constant 0.327591091 : f32
    %207 = vector.broadcast %cst_64 : f32 to vector<16x32xf32>
    %208 = arith.mulf %207, %206 : vector<16x32xf32>
    %cst_65 = arith.constant 1.000000e+00 : f32
    %209 = vector.broadcast %cst_65 : f32 to vector<16x32xf32>
    %210 = arith.addf %209, %208 : vector<16x32xf32>
    %cst_66 = arith.constant 1.000000e+00 : f32
    %211 = vector.broadcast %cst_66 : f32 to vector<16x32xf32>
    %212 = arith.divf %211, %210 : vector<16x32xf32>
    %cst_67 = arith.constant 1.06140542 : f32
    %213 = vector.broadcast %cst_67 : f32 to vector<16x32xf32>
    %214 = arith.mulf %213, %212 : vector<16x32xf32>
    %cst_68 = arith.constant -1.45315206 : f32
    %215 = vector.broadcast %cst_68 : f32 to vector<16x32xf32>
    %216 = arith.addf %214, %215 : vector<16x32xf32>
    %217 = arith.mulf %216, %212 : vector<16x32xf32>
    %cst_69 = arith.constant 1.42141378 : f32
    %218 = vector.broadcast %cst_69 : f32 to vector<16x32xf32>
    %219 = arith.addf %217, %218 : vector<16x32xf32>
    %220 = arith.mulf %219, %212 : vector<16x32xf32>
    %cst_70 = arith.constant -0.284496725 : f32
    %221 = vector.broadcast %cst_70 : f32 to vector<16x32xf32>
    %222 = arith.addf %220, %221 : vector<16x32xf32>
    %223 = arith.mulf %222, %212 : vector<16x32xf32>
    %cst_71 = arith.constant 0.254829586 : f32
    %224 = vector.broadcast %cst_71 : f32 to vector<16x32xf32>
    %225 = arith.addf %223, %224 : vector<16x32xf32>
    %226 = arith.mulf %225, %212 : vector<16x32xf32>
    %cst_72 = arith.constant 0.000000e+00 : f32
    %227 = vector.broadcast %cst_72 : f32 to vector<16x32xf32>
    %228 = arith.subf %227, %206 : vector<16x32xf32>
    %229 = arith.mulf %228, %206 : vector<16x32xf32>
    %230 = math.exp %229 : vector<16x32xf32>
    %231 = arith.mulf %226, %230 : vector<16x32xf32>
    %cst_73 = arith.constant 1.000000e+00 : f32
    %232 = vector.broadcast %cst_73 : f32 to vector<16x32xf32>
    %233 = arith.subf %232, %231 : vector<16x32xf32>
    %234 = arith.mulf %205, %233 : vector<16x32xf32>
    %cst_74 = arith.constant 1.000000e+00 : f32
    %235 = vector.broadcast %cst_74 : f32 to vector<16x32xf32>
    %236 = arith.addf %235, %234 : vector<16x32xf32>
    %237 = arith.mulf %198, %236 : vector<16x32xf32>
    %238 = arith.truncf %237 : vector<16x32xf32> to vector<16x32xbf16>
    %c0_75 = arith.constant 0 : index
    %c0_76 = arith.constant 0 : index
    %239 = vector.load %arg10[%c0_75, %c0_76] : memref<32x32xbf16, #tpu.memory_space<vmem>>, vector<32x32xbf16>
    %cst_77 = arith.constant dense<0.000000e+00> : vector<16x32xf32>
    %240 = tpu.matmul %238, %239, %cst_77 {dimension_numbers = #tpu.dot_dimension_numbers<[1], [0], [0], [1], [0, 0, 1, 1], [], []>} : vector<16x32xbf16>, vector<32x32xbf16>, vector<16x32xf32> -> vector<16x32xf32>
    %241 = arith.addf %240, %193 : vector<16x32xf32>
    %242 = arith.addf %241, %14 : vector<16x32xf32>
    %243 = vector.shape_cast %242 : vector<16x32xf32> to vector<2x8x32xf32>
    %c0_78 = arith.constant 0 : index
    %c0_79 = arith.constant 0 : index
    %c0_80 = arith.constant 0 : index
    %244 = vector.load %arg11[%c0_78, %c0_79, %c0_80] : memref<2x8x32xf32, #tpu.memory_space<vmem>>, vector<2x8x32xf32>
    tpu.vector_store %arg11[%c0_78, %c0_79, %c0_80], %243 {strides = array<i32>} : memref<2x8x32xf32, #tpu.memory_space<vmem>>, vector<2x8x32xf32>,
    return
  }
  func.func @transform_0(%arg0: i32) -> (i32, i32, i32) {
    %c0_i32 = arith.constant 0 : i32
    %c0_i32_0 = arith.constant 0 : i32
    %c0_i32_1 = arith.constant 0 : i32
    return %arg0, %c0_i32, %c0_i32_0 : i32, i32, i32
  }
  func.func @transform_1(%arg0: i32) -> (i32, i32) {
    %c0_i32 = arith.constant 0 : i32
    %c0_i32_0 = arith.constant 0 : i32
    %c0_i32_1 = arith.constant 0 : i32
    return %c0_i32, %c0_i32_0 : i32, i32
  }
  func.func @transform_2(%arg0: i32) -> (i32, i32) {
    %c0_i32 = arith.constant 0 : i32
    %c0_i32_0 = arith.constant 0 : i32
    %c0_i32_1 = arith.constant 0 : i32
    return %c0_i32, %c0_i32_0 : i32, i32
  }
  func.func @transform_3(%arg0: i32) -> (i32, i32) {
    %c0_i32 = arith.constant 0 : i32
    %c0_i32_0 = arith.constant 0 : i32
    %c0_i32_1 = arith.constant 0 : i32
    return %c0_i32, %c0_i32_0 : i32, i32
  }
  func.func @transform_4(%arg0: i32) -> (i32, i32) {
    %c0_i32 = arith.constant 0 : i32
    %c0_i32_0 = arith.constant 0 : i32
    %c0_i32_1 = arith.constant 0 : i32
    return %c0_i32, %c0_i32_0 : i32, i32
  }
  func.func @transform_5(%arg0: i32) -> (i32, i32) {
    %c0_i32 = arith.constant 0 : i32
    %c0_i32_0 = arith.constant 0 : i32
    %c0_i32_1 = arith.constant 0 : i32
    return %c0_i32, %c0_i32_0 : i32, i32
  }
  func.func @transform_6(%arg0: i32) -> (i32, i32) {
    %c0_i32 = arith.constant 0 : i32
    %c0_i32_0 = arith.constant 0 : i32
    %c0_i32_1 = arith.constant 0 : i32
    return %c0_i32, %c0_i32_0 : i32, i32
  }
  func.func @transform_7(%arg0: i32) -> (i32, i32) {
    %c0_i32 = arith.constant 0 : i32
    %c0_i32_0 = arith.constant 0 : i32
    %c0_i32_1 = arith.constant 0 : i32
    return %c0_i32, %c0_i32_0 : i32, i32
  }
  func.func @transform_8(%arg0: i32) -> (i32, i32) {
    %c0_i32 = arith.constant 0 : i32
    %c0_i32_0 = arith.constant 0 : i32
    %c0_i32_1 = arith.constant 0 : i32
    return %c0_i32, %c0_i32_0 : i32, i32
  }
  func.func @transform_9(%arg0: i32) -> (i32, i32) {
    %c0_i32 = arith.constant 0 : i32
    %c0_i32_0 = arith.constant 0 : i32
    %c0_i32_1 = arith.constant 0 : i32
    return %c0_i32, %c0_i32_0 : i32, i32
  }
  func.func @transform_10(%arg0: i32) -> (i32, i32, i32) {
    %c0_i32 = arith.constant 0 : i32
    %c0_i32_0 = arith.constant 0 : i32
    %c0_i32_1 = arith.constant 0 : i32
    return %arg0, %c0_i32, %c0_i32_0 : i32, i32, i32
  }
}

</mosaic_0001>

<llo_original>
// kernel: tpu_custom_call.1
$region0: #{tpu_custom_call.1}
  #allocation0 [shape = 'u32[]', space=smem, size = 0x4, offset = 0x4, fixed_abs, tag = 'smem constant byte address 0x4 - core index']
  #allocation1 [shape = 'u32[144,128]{1,0:T(1,128)}', space=vmem, size = 0x12000, scoped, tag = 'internal scratch']
  %s0 = inlined_call_operand.hbm [shape: f32[2,8,16], index: 0, kind: input, shape index: {}]
  %s1 = inlined_call_operand.hbm [shape: bf16[16,32], index: 1, kind: input, shape index: {}]
  %s2 = inlined_call_operand.hbm [shape: f32[1,32], index: 2, kind: input, shape index: {}]
  %s3 = inlined_call_operand.hbm [shape: f32[1,32], index: 3, kind: input, shape index: {}]
  %s4 = inlined_call_operand.hbm [shape: f32[1,32], index: 4, kind: input, shape index: {}]
  %s5 = inlined_call_operand.hbm [shape: f32[1,32], index: 5, kind: input, shape index: {}]
  %s6 = inlined_call_operand.hbm [shape: bf16[32,96], index: 6, kind: input, shape index: {}]
  %s7 = inlined_call_operand.hbm [shape: bf16[32,32], index: 7, kind: input, shape index: {}]
  %s8 = inlined_call_operand.hbm [shape: bf16[32,32], index: 8, kind: input, shape index: {}]
  %s9 = inlined_call_operand.vmem [shape: bf16[32,32], index: 9, kind: input, shape index: {}]
  %s10 = inlined_call_operand.hbm [shape: f32[2,8,32], index: 10, kind: output, shape index: {}]
  %s11 = sld [smem:[#allocation0]]
  $region86: #{tpu_custom_call.1} parent=0
    _
  %s13 = ssub.s32 1, %s11
  %s14 = scalar_select 0, %s13, %s11
  $region1: #{tpu_custom_call.1} parent=0
    #allocation2 [shape = 'u8[8192]{0}', space=vmem, size = 0x2000, scoped, tag = 'input window, operand 0, single buffered']
    #allocation3 [shape = 's32[1]{0}', space=sflag, size = 0x4, scoped, tag = 'scoped memory for tpu_custom_call.1']
    #allocation4 [shape = 's32[1]{0}', space=sflag, size = 0x4, scoped, tag = 'scoped memory for tpu_custom_call.1']
    #allocation5 [shape = 'u8[4096]{0}', space=vmem, size = 0x1000, scoped, tag = 'input window, operand 1, single buffered']
    #allocation6 [shape = 's32[1]{0}', space=sflag, size = 0x4, scoped, tag = 'scoped memory for tpu_custom_call.1']
    #allocation7 [shape = 'u8[512]{0}', space=vmem, size = 0x400, scoped, tag = 'input window, operand 2, single buffered']
    #allocation8 [shape = 'u8[512]{0}', space=vmem, size = 0x400, scoped, tag = 'input window, operand 3, single buffered']
    #allocation9 [shape = 's32[1]{0}', space=sflag, size = 0x4, scoped, tag = 'scoped memory for tpu_custom_call.1']
    #allocation10 [shape = 'u8[512]{0}', space=vmem, size = 0x400, scoped, tag = 'input window, operand 4, single buffered']
    #allocation11 [shape = 'u8[512]{0}', space=vmem, size = 0x400, scoped, tag = 'input window, operand 5, single buffered']
    #allocation12 [shape = 's32[1]{0}', space=sflag, size = 0x4, scoped, tag = 'scoped memory for tpu_custom_call.1']
    #allocation13 [shape = 'u8[8192]{0}', space=vmem, size = 0x2000, scoped, tag = 'input window, operand 6, single buffered']
    #allocation14 [shape = 'u8[8192]{0}', space=vmem, size = 0x2000, scoped, tag = 'input window, operand 7, single buffered']
    #allocation15 [shape = 's32[1]{0}', space=sflag, size = 0x4, scoped, tag = 'scoped memory for tpu_custom_call.1']
    #allocation16 [shape = 'u8[8192]{0}', space=vmem, size = 0x2000, scoped, tag = 'input window, operand 8, single buffered']
    #allocation17 [shape = 'u8[8192]{0}', space=vmem, size = 0x2000, scoped, tag = 'output window, operand 0, single buffered']
    %15 = vsyncpa [#allocation3], 0
    %16 = vsyncpa [#allocation6], 0
    %17 = vsyncpa [#allocation9], 0
    %18 = vsyncpa [#allocation12], 0
    %19 = vsyncpa [#allocation15], 0
    %20 = vsyncpa [#allocation4], 0
    // Predicated region
    $region2: #{tpu_custom_call.1} parent=1 // pred_check
      _
    $region3: #{tpu_custom_call.1} parent=1 // pred_check_branch
      %22 = sbr.rel (0) target = $region5
    $region4: #{tpu_custom_call.1} parent=1 // pred_region
      %s24 = ssub.s32 256, 256
      %25 = vsyncadd [#allocation3], %s24
      %s26 = sshll.u32 [#allocation2], 4
      %s27 = int_to_ptr.vmem [resolvable:$true] %s26
      %32 = dma.hbm_to_vmem [thread:$0]  %s0, 256, %s27, [#allocation3], 128, 128, 8
    $region5: #{tpu_custom_call.1} parent=1 // pred_fallthru
      _
    // Predicated region
    $region6: #{tpu_custom_call.1} parent=1 // pred_check
      _
    $region7: #{tpu_custom_call.1} parent=1 // pred_check_branch
      %34 = sbr.rel (0) target = $region9
    $region8: #{tpu_custom_call.1} parent=1 // pred_region
      %s36 = ssub.s32 128, 128
      %37 = vsyncadd [#allocation6], %s36
      %s38 = sshll.u32 [#allocation5], 4
      %s39 = int_to_ptr.vmem [resolvable:$true] %s38
      %44 = dma.hbm_to_vmem [thread:$0]  %s1, 128, %s39, [#allocation6], 64, 64, 4
    $region9: #{tpu_custom_call.1} parent=1 // pred_fallthru
      _
    // Predicated region
    $region10: #{tpu_custom_call.1} parent=1 // pred_check
      _
    $region11: #{tpu_custom_call.1} parent=1 // pred_check_branch
      %46 = sbr.rel (0) target = $region13
    $region12: #{tpu_custom_call.1} parent=1 // pred_region
      %s48 = ssub.s32 16, 16
      %49 = vsyncadd [#allocation6], %s48
      %s51 = sshll.u32 [#allocation7], 4
      %s52 = int_to_ptr.vmem [resolvable:$true] %s51
      %54 = dma.hbm_to_vmem [thread:$0]  %s2, 16, %s52, [#allocation6]
    $region13: #{tpu_custom_call.1} parent=1 // pred_fallthru
      _
    // Predicated region
    $region14: #{tpu_custom_call.1} parent=1 // pred_check
      _
    $region15: #{tpu_custom_call.1} parent=1 // pred_check_branch
      %56 = sbr.rel (0) target = $region17
    $region16: #{tpu_custom_call.1} parent=1 // pred_region
      %s58 = ssub.s32 16, 16
      %59 = vsyncadd [#allocation9], %s58
      %s61 = sshll.u32 [#allocation8], 4
      %s62 = int_to_ptr.vmem [resolvable:$true] %s61
      %64 = dma.hbm_to_vmem [thread:$0]  %s3, 16, %s62, [#allocation9]
    $region17: #{tpu_custom_call.1} parent=1 // pred_fallthru
      _
    // Predicated region
    $region18: #{tpu_custom_call.1} parent=1 // pred_check
      _
    $region19: #{tpu_custom_call.1} parent=1 // pred_check_branch
      %66 = sbr.rel (0) target = $region21
    $region20: #{tpu_custom_call.1} parent=1 // pred_region
      %s68 = ssub.s32 16, 16
      %69 = vsyncadd [#allocation9], %s68
      %s71 = sshll.u32 [#allocation10], 4
      %s72 = int_to_ptr.vmem [resolvable:$true] %s71
      %74 = dma.hbm_to_vmem [thread:$0]  %s4, 16, %s72, [#allocation9]
    $region21: #{tpu_custom_call.1} parent=1 // pred_fallthru
      _
    // Predicated region
    $region22: #{tpu_custom_call.1} parent=1 // pred_check
      _
    $region23: #{tpu_custom_call.1} parent=1 // pred_check_branch
      %76 = sbr.rel (0) target = $region25
    $region24: #{tpu_custom_call.1} parent=1 // pred_region
      %s78 = ssub.s32 16, 16
      %79 = vsyncadd [#allocation12], %s78
      %s81 = sshll.u32 [#allocation11], 4
      %s82 = int_to_ptr.vmem [resolvable:$true] %s81
      %84 = dma.hbm_to_vmem [thread:$0]  %s5, 16, %s82, [#allocation12]
    $region25: #{tpu_custom_call.1} parent=1 // pred_fallthru
      _
    // Predicated region
    $region26: #{tpu_custom_call.1} parent=1 // pred_check
      _
    $region27: #{tpu_custom_call.1} parent=1 // pred_check_branch
      %86 = sbr.rel (0) target = $region29
    $region28: #{tpu_custom_call.1} parent=1 // pred_region
      %s88 = ssub.s32 256, 256
      %89 = vsyncadd [#allocation12], %s88
      %s90 = sshll.u32 [#allocation13], 4
      %s91 = int_to_ptr.vmem [resolvable:$true] %s90
      %96 = dma.hbm_to_vmem [thread:$0]  %s6, 256, %s91, [#allocation12], 64, 64, 4
    $region29: #{tpu_custom_call.1} parent=1 // pred_fallthru
      _
    // Predicated region
    $region30: #{tpu_custom_call.1} parent=1 // pred_check
      _
    $region31: #{tpu_custom_call.1} parent=1 // pred_check_branch
      %98 = sbr.rel (0) target = $region33
    $region32: #{tpu_custom_call.1} parent=1 // pred_region
      %s100 = ssub.s32 256, 256
      %101 = vsyncadd [#allocation15], %s100
      %s102 = sshll.u32 [#allocation14], 4
      %s103 = int_to_ptr.vmem [resolvable:$true] %s102
      %108 = dma.hbm_to_vmem [thread:$0]  %s7, 256, %s103, [#allocation15], 64, 64, 4
    $region33: #{tpu_custom_call.1} parent=1 // pred_fallthru
      _
    // Predicated region
    $region34: #{tpu_custom_call.1} parent=1 // pred_check
      _
    $region35: #{tpu_custom_call.1} parent=1 // pred_check_branch
      %110 = sbr.rel (0) target = $region37
    $region36: #{tpu_custom_call.1} parent=1 // pred_region
      %s112 = ssub.s32 256, 256
      %113 = vsyncadd [#allocation15], %s112
      %s114 = sshll.u32 [#allocation16], 4
      %s115 = int_to_ptr.vmem [resolvable:$true] %s114
      %120 = dma.hbm_to_vmem [thread:$0]  %s8, 256, %s115, [#allocation15], 64, 64, 4
    $region37: #{tpu_custom_call.1} parent=1 // pred_fallthru
      _
    // Predicated region
    $region38: #{tpu_custom_call.1} parent=1 // pred_check
      _
    $region39: #{tpu_custom_call.1} parent=1 // pred_check_branch
      %122 = sbr.rel (0) target = $region41
    $region40: #{tpu_custom_call.1} parent=1 // pred_region
      _
    $region41: #{tpu_custom_call.1} parent=1 // pred_fallthru
      _
    // Predicated region
    $region42: #{tpu_custom_call.1} parent=1 // pred_check
      _
    $region43: #{tpu_custom_call.1} parent=1 // pred_check_branch
      %124 = sbr.rel (0) target = $region45
    $region44: #{tpu_custom_call.1} parent=1 // pred_region
      %125 = dma.done [#allocation3], 256
    $region45: #{tpu_custom_call.1} parent=1 // pred_fallthru
      _
    // Predicated region
    $region46: #{tpu_custom_call.1} parent=1 // pred_check
      _
    $region47: #{tpu_custom_call.1} parent=1 // pred_check_branch
      %127 = sbr.rel (0) target = $region49
    $region48: #{tpu_custom_call.1} parent=1 // pred_region
      %128 = dma.done [#allocation6], 128
    $region49: #{tpu_custom_call.1} parent=1 // pred_fallthru
      _
    // Predicated region
    $region50: #{tpu_custom_call.1} parent=1 // pred_check
      _
    $region51: #{tpu_custom_call.1} parent=1 // pred_check_branch
      %130 = sbr.rel (0) target = $region53
    $region52: #{tpu_custom_call.1} parent=1 // pred_region
      %131 = dma.done [#allocation6], 16
    $region53: #{tpu_custom_call.1} parent=1 // pred_fallthru
      _
    // Predicated region
    $region54: #{tpu_custom_call.1} parent=1 // pred_check
      _
    $region55: #{tpu_custom_call.1} parent=1 // pred_check_branch
      %133 = sbr.rel (0) target = $region57
    $region56: #{tpu_custom_call.1} parent=1 // pred_region
      %134 = dma.done [#allocation9], 16
    $region57: #{tpu_custom_call.1} parent=1 // pred_fallthru
      _
    // Predicated region
    $region58: #{tpu_custom_call.1} parent=1 // pred_check
      _
    $region59: #{tpu_custom_call.1} parent=1 // pred_check_branch
      %136 = sbr.rel (0) target = $region61
    $region60: #{tpu_custom_call.1} parent=1 // pred_region
      %137 = dma.done [#allocation9], 16
    $region61: #{tpu_custom_call.1} parent=1 // pred_fallthru
      _
    // Predicated region
    $region62: #{tpu_custom_call.1} parent=1 // pred_check
      _
    $region63: #{tpu_custom_call.1} parent=1 // pred_check_branch
      %139 = sbr.rel (0) target = $region65
    $region64: #{tpu_custom_call.1} parent=1 // pred_region
      %140 = dma.done [#allocation12], 16
    $region65: #{tpu_custom_call.1} parent=1 // pred_fallthru
      _
    // Predicated region
    $region66: #{tpu_custom_call.1} parent=1 // pred_check
      _
    $region67: #{tpu_custom_call.1} parent=1 // pred_check_branch
      %142 = sbr.rel (0) target = $region69
    $region68: #{tpu_custom_call.1} parent=1 // pred_region
      %143 = dma.done [#allocation12], 256
    $region69: #{tpu_custom_call.1} parent=1 // pred_fallthru
      _
    // Predicated region
    $region70: #{tpu_custom_call.1} parent=1 // pred_check
      _
    $region71: #{tpu_custom_call.1} parent=1 // pred_check_branch
      %145 = sbr.rel (0) target = $region73
    $region72: #{tpu_custom_call.1} parent=1 // pred_region
      %146 = dma.done [#allocation15], 256
    $region73: #{tpu_custom_call.1} parent=1 // pred_fallthru
      _
    // Predicated region
    $region74: #{tpu_custom_call.1} parent=1 // pred_check
      _
    $region75: #{tpu_custom_call.1} parent=1 // pred_check_branch
      %148 = sbr.rel (0) target = $region77
    $region76: #{tpu_custom_call.1} parent=1 // pred_region
      %149 = dma.done [#allocation15], 256
    $region77: #{tpu_custom_call.1} parent=1 // pred_fallthru
      _
    %v151 = vld [vmem:[#allocation2] sm:$0xff]
    %v152 = vld [vmem:[#allocation2 + $0x8] sm:$0xff]
    %v153 = vpack.c.bf16 %v152, %v151
    %v154 = vld [vmem:[#allocation5] sm:$0xf]
    %v155 = vld [vmem:[#allocation5 + $0x4] sm:$0xf]
    %v158 = vunpack.c.l.b16 %v154
    %v159 = vunpack.c.l.b16 %v155
    %v160 = vpack.c.b16 %v159, %v158
    %vm162 = vcmask 130048
    %v164 = vsel %vm162, %v153, 0
    %166 = vmatprep.subr.bf16.mxu0 0
    %167 = vmatpush1.bf16.msra.mxu0 0
    %168 = vmatprep.subr.bf16.mxu0 0
    %169 = vmatpush1.bf16.msra.mxu0 0
    %170 = vmatprep.subr.bf16.mxu0 0
    %171 = vmatpush1.bf16.msra.mxu0 0
    %172 = vmatprep.subr.bf16.mxu0 0
    %173 = vmatpush1.bf16.msra.mxu0 0
    %174 = vmatprep.subr.bf16.mxu0 0
    %175 = vmatpush1.bf16.msra.mxu0 0
    %176 = vmatprep.subr.bf16.mxu0 0
    %177 = vmatpush1.bf16.msra.mxu0 0
    %178 = vmatprep.subr.bf16.mxu0 0
    %179 = vmatpush1.bf16.msra.mxu0 0
    %180 = vmatprep.subr.bf16.mxu0 0
    %181 = vmatpush1.bf16.msra.mxu0 %v160
    %182 = vmatprep.subr.bf16.mxu0 0
    %183 = vmatpush2.bf16.msra.mxu0 0
    %184 = vmatprep.subr.bf16.mxu0 0
    %185 = vmatpush2.bf16.msra.mxu0 0
    %186 = vmatprep.subr.bf16.mxu0 0
    %187 = vmatpush2.bf16.msra.mxu0 0
    %188 = vmatprep.subr.bf16.mxu0 0
    %189 = vmatpush2.bf16.msra.mxu0 0
    %190 = vmatprep.subr.bf16.mxu0 0
    %191 = vmatpush2.bf16.msra.mxu0 0
    %192 = vmatprep.subr.bf16.mxu0 0
    %193 = vmatpush2.bf16.msra.mxu0 0
    %194 = vmatprep.subr.bf16.mxu0 0
    %195 = vmatpush2.bf16.msra.mxu0 0
    %196 = vmatprep.subr.bf16.mxu0 0
    %197 = vmatpush2.bf16.msra.mxu0 0
    %198 = vmatprep.mubr.bf16.mxu0 0
    %199 = vmatmul.mubr.bf16.gmra.mxu0 %v164
    %v200 = vpop.f32.mrf.mxu0
    %v201 = vadd.f32 0.0, %v200
    %v202 = vpop.f32.mrf.mxu0
    %v203 = vpop.f32.mrf.mxu0
    %v204 = vadd.f32 0.0, %v203
    %v205 = vpop.f32.mrf.mxu0
    %206 = vdwg.mxu0
    %v207 = vand.u32 2147483647, %v151
    %v208 = vand.u32 2147483647, %v152
    %v209 = vsel %vm162, %v207, -inf
    %210 = vmax.xlane.f32.xlu0 %v209
    %v211 = vpop.xlane.xlu0 %210
    %v212 = vsel %vm162, %v208, -inf
    %213 = vmax.xlane.f32.xlu0 %v212
    %v214 = vpop.xlane.xlu0 %213
    %vm215 = vcmp.gt.f32.partialorder %v211, 0.0
    %vm216 = vcmp.gt.f32.partialorder %v214, 0.0
    %v217 = vsel %vm215, 1, 0
    %v218 = vsel %vm216, 1, 0
    %v219 = vcvt.s32.f32 %v217
    %v220 = vcvt.s32.f32 %v218
    %v221 = vand.u32 2147483647, %v201
    %vm222 = vcmp.le.f32.partialorder %v221, 0.7853982
    %vm223 = vcmp.lt.s32.totalorder %v201, 0
    %v224 = vand.u32 %v201, 2139095040
    %v225 = vshrl.u32 %v224, 23
    %v226 = vsub.s32 %v225, 127
    %v227 = vand.u32 2147483647, %v201
    %v228 = vand.u32 %v227, 8388607
    %v229 = vor.u32 %v228, 8388608
    %v230 = vsub.s32 0, %v229
    %v231 = vadd.s32 %v226, 1
    %vm232 = vcmp.gt.s32.totalorder %v231, 0
    %v233 = vsel %vm232, %v231, 0
    %v234 = vshrl.u32 %v233, 5
    %v235 = vand.u32 %v233, 31
    %v236 = vsub.s32 32, %v235
    %v237 = vshrl.u32 683565275, %v236
    %v238 = vshll.u32 683565275, %v235
    %v239 = vshrl.u32 2475754826, %v236
    %v240 = vor.u32 %v238, %v239
    %v241 = vshll.u32 2475754826, %v235
    %v242 = vshrl.u32 2131351028, %v236
    %v243 = vor.u32 %v241, %v242
    %v244 = vshll.u32 2131351028, %v235
    %v245 = vshrl.u32 2102212464, %v236
    %v246 = vor.u32 %v244, %v245
    %v247 = vshll.u32 2102212464, %v235
    %v248 = vshrl.u32 920167782, %v236
    %v249 = vor.u32 %v247, %v248
    %v250 = vshll.u32 920167782, %v235
    %v251 = vshrl.u32 1326507024, %v236
    %v252 = vor.u32 %v250, %v251
    %vm253 = vcmp.lt.s32.totalorder %v234, 1
    %vm254 = vcmp.lt.s32.totalorder %v234, 2
    %vm255 = vcmp.lt.s32.totalorder %v234, 3
    %vm256 = vcmp.lt.s32.totalorder %v234, 4
    %v257 = vsel %vm253, %v237, %v240
    %v258 = vsel %vm256, %v246, 2102212464
    %v259 = vsel %vm255, %v243, %v258
    %v260 = vsel %vm254, %v257, %v259
    %v261 = vsel %vm253, %v240, %v243
    %v262 = vsel %vm256, %v249, 920167782
    %v263 = vsel %vm255, %v246, %v262
    %v264 = vsel %vm254, %v261, %v263
    %v265 = vsel %vm253, %v243, %v246
    %v266 = vsel %vm256, %v252, 1326507024
    %v267 = vsel %vm255, %v249, %v266
    %v268 = vsel %vm254, %v265, %v267
    %v269 = vshll.u32 %v229, 8
    %v270 = vmul.u32.u64.compose %v269, %v268
    %v271 = vextract.low.u32 %v270
    %v272 = vextract.high.u32 %v270
    %v273 = vmul.u32.u64.compose %v269, %v264
    %v274 = vextract.low.u32 %v273
    %v275 = vextract.high.u32 %v273
    %v276 = vmul.u32 %v269, %v260
    %v277 = vadd.s32 %v272, %v274
    %vm278 = vc.u32 %v272, %v274
    %v279 = vadd.s32 %v275, 1
    %v280 = vsel %vm278, %v279, %v275
    %v281 = vadd.s32 %v276, %v280
    %v282 = vadd.s32 %v281, 536870912
    %v283 = vshrl.u32 %v282, 30
    %v284 = vshll.u32 %v283, 30
    %v285 = vsub.s32 %v281, %v284
    %vm286 = vcmp.lt.s32.totalorder %v285, 0
    %v287 = vsub.s32 0, %v285
    %v288 = vsel %vm286, %v287, %v285
    %v289 = vclz %v288
    %v290 = vsub.s32 %v289, 2
    %vm291 = vcmp.gt.s32.totalorder 0, %v290
    %v292 = vsel %vm291, 0, %v290
    %v293 = vsub.s32 32, %v292
    %v294 = vshll.u32 %v285, %v292
    %v295 = vshrl.u32 %v277, %v293
    %v296 = vor.u32 %v294, %v295
    %v297 = vsub.s32 4294967266, %v292
    %v298 = vadd.s32 %v297, 127
    %v299 = vshll.u32 %v298, 23
    %v300 = vor.u32 4788187, %v299
    %v301 = vand.u32 2147483647, %v300
    %v303 = vcvt.s32.f32 %v296
    %v304 = vmul.f32 %v303, %v301
    %v305 = vxor.u32 %v304, 2147483648
    %v306 = vsel %vm223, %v305, %v304
    %v307 = vsub.s32 4, %v283
    %v308 = vsel %vm223, %v307, %v283
    %v309 = vsel %vm222, %v201, %v306
    %v310 = vsel %vm222, 0, %v308
    %v311 = vcosq.f32.pop %v309
    %v312 = vsinq.f32.pop %v309
    %vm313 = vweird.f32 %v201
    %v314 = vadd.s32 %v310, 3
    %v315 = vand.u32 %v314, 3
    %vm316 = vcmp.lt.s32.totalorder %v315, 2
    %vm317 = vcmp.eq.s32.totalorder %v315, 0
    %v318 = vxor.u32 %v312, 2147483648
    %v319 = vsel %vm317, %v311, %v318
    %vm320 = vcmp.eq.s32.totalorder %v315, 2
    %v321 = vxor.u32 %v311, 2147483648
    %v322 = vsel %vm320, %v321, %v312
    %v323 = vsel %vm316, %v319, %v322
    %v324 = vsel %vm313, nan, %v323
    %v325 = vand.u32 2147483647, %v204
    %vm326 = vcmp.le.f32.partialorder %v325, 0.7853982
    %vm327 = vcmp.lt.s32.totalorder %v204, 0
    %v328 = vand.u32 %v204, 2139095040
    %v329 = vshrl.u32 %v328, 23
    %v330 = vsub.s32 %v329, 127
    %v331 = vand.u32 2147483647, %v204
    %v332 = vand.u32 %v331, 8388607
    %v333 = vor.u32 %v332, 8388608
    %v334 = vsub.s32 0, %v333
    %v335 = vadd.s32 %v330, 1
    %vm336 = vcmp.gt.s32.totalorder %v335, 0
    %v337 = vsel %vm336, %v335, 0
    %v338 = vshrl.u32 %v337, 5
    %v339 = vand.u32 %v337, 31
    %v340 = vsub.s32 32, %v339
    %v341 = vshrl.u32 683565275, %v340
    %v342 = vshll.u32 683565275, %v339
    %v343 = vshrl.u32 2475754826, %v340
    %v344 = vor.u32 %v342, %v343
    %v345 = vshll.u32 2475754826, %v339
    %v346 = vshrl.u32 2131351028, %v340
    %v347 = vor.u32 %v345, %v346
    %v348 = vshll.u32 2131351028, %v339
    %v349 = vshrl.u32 2102212464, %v340
    %v350 = vor.u32 %v348, %v349
    %v351 = vshll.u32 2102212464, %v339
    %v352 = vshrl.u32 920167782, %v340
    %v353 = vor.u32 %v351, %v352
    %v354 = vshll.u32 920167782, %v339
    %v355 = vshrl.u32 1326507024, %v340
    %v356 = vor.u32 %v354, %v355
    %vm357 = vcmp.lt.s32.totalorder %v338, 1
    %vm358 = vcmp.lt.s32.totalorder %v338, 2
    %vm359 = vcmp.lt.s32.totalorder %v338, 3
    %vm360 = vcmp.lt.s32.totalorder %v338, 4
    %v361 = vsel %vm357, %v341, %v344
    %v362 = vsel %vm360, %v350, 2102212464
    %v363 = vsel %vm359, %v347, %v362
    %v364 = vsel %vm358, %v361, %v363
    %v365 = vsel %vm357, %v344, %v347
    %v366 = vsel %vm360, %v353, 920167782
    %v367 = vsel %vm359, %v350, %v366
    %v368 = vsel %vm358, %v365, %v367
    %v369 = vsel %vm357, %v347, %v350
    %v370 = vsel %vm360, %v356, 1326507024
    %v371 = vsel %vm359, %v353, %v370
    %v372 = vsel %vm358, %v369, %v371
    %v373 = vshll.u32 %v333, 8
    %v374 = vmul.u32.u64.compose %v373, %v372
    %v375 = vextract.low.u32 %v374
    %v376 = vextract.high.u32 %v374
    %v377 = vmul.u32.u64.compose %v373, %v368
    %v378 = vextract.low.u32 %v377
    %v379 = vextract.high.u32 %v377
    %v380 = vmul.u32 %v373, %v364
    %v381 = vadd.s32 %v376, %v378
    %vm382 = vc.u32 %v376, %v378
    %v383 = vadd.s32 %v379, 1
    %v384 = vsel %vm382, %v383, %v379
    %v385 = vadd.s32 %v380, %v384
    %v386 = vadd.s32 %v385, 536870912
    %v387 = vshrl.u32 %v386, 30
    %v388 = vshll.u32 %v387, 30
    %v389 = vsub.s32 %v385, %v388
    %vm390 = vcmp.lt.s32.totalorder %v389, 0
    %v391 = vsub.s32 0, %v389
    %v392 = vsel %vm390, %v391, %v389
    %v393 = vclz %v392
    %v394 = vsub.s32 %v393, 2
    %vm395 = vcmp.gt.s32.totalorder 0, %v394
    %v396 = vsel %vm395, 0, %v394
    %v397 = vsub.s32 32, %v396
    %v398 = vshll.u32 %v389, %v396
    %v399 = vshrl.u32 %v381, %v397
    %v400 = vor.u32 %v398, %v399
    %v401 = vsub.s32 4294967266, %v396
    %v402 = vadd.s32 %v401, 127
    %v403 = vshll.u32 %v402, 23
    %v404 = vor.u32 4788187, %v403
    %v405 = vand.u32 2147483647, %v404
    %v407 = vcvt.s32.f32 %v400
    %v408 = vmul.f32 %v407, %v405
    %v409 = vxor.u32 %v408, 2147483648
    %v410 = vsel %vm327, %v409, %v408
    %v411 = vsub.s32 4, %v387
    %v412 = vsel %vm327, %v411, %v387
    %v413 = vsel %vm326, %v204, %v410
    %v414 = vsel %vm326, 0, %v412
    %v415 = vcosq.f32.pop %v413
    %v416 = vsinq.f32.pop %v413
    %vm417 = vweird.f32 %v204
    %v418 = vadd.s32 %v414, 3
    %v419 = vand.u32 %v418, 3
    %vm420 = vcmp.lt.s32.totalorder %v419, 2
    %vm421 = vcmp.eq.s32.totalorder %v419, 0
    %v422 = vxor.u32 %v416, 2147483648
    %v423 = vsel %vm421, %v415, %v422
    %vm424 = vcmp.eq.s32.totalorder %v419, 2
    %v425 = vxor.u32 %v415, 2147483648
    %v426 = vsel %vm424, %v425, %v416
    %v427 = vsel %vm420, %v423, %v426
    %v428 = vsel %vm417, nan, %v427
    %v429 = vmul.f32 %v324, %v219
    %v430 = vmul.f32 %v428, %v220
    %v431 = vld [vmem:[#allocation7] sm:$0x1]
    %v432 = vld [vmem:[#allocation8] sm:$0x1]
    %vm433 = vcmask 261120
    %v434 = vsel %vm433, %v429, 0.0
    %435 = vadd.xlane.f32.xlu0 %v434
    %v436 = vpop.xlane.xlu0 %435
    %v437 = vsel %vm433, %v430, 0.0
    %438 = vadd.xlane.f32.xlu0 %v437
    %v439 = vpop.xlane.xlu0 %438
    %v440 = vrcp.pop 32.0
    %v441 = vmul.f32 %v436, %v440
    %v442 = vmul.f32 %v439, %v440
    %v443 = vsub.f32 %v429, %v441
    %v444 = vsub.f32 %v430, %v442
    %v445 = vmul.f32 %v443, %v443
    %v446 = vmul.f32 %v444, %v444
    %v447 = vsel %vm433, %v445, 0.0
    %448 = vadd.xlane.f32.xlu0 %v447
    %v449 = vpop.xlane.xlu0 %448
    %v450 = vsel %vm433, %v446, 0.0
    %451 = vadd.xlane.f32.xlu0 %v450
    %v452 = vpop.xlane.xlu0 %451
    %v453 = vmul.f32 %v449, %v440
    %v454 = vmul.f32 %v452, %v440
    %v455 = vadd.f32 %v453, 1e-05
    %v456 = vadd.f32 %v454, 1e-05
    %v457 = vrsqrt.pop %v455
    %v458 = vrsqrt.pop %v456
    %v459 = vmul.f32 %v443, %v457
    %v460 = vmul.f32 %v444, %v458
    %v462 = vlaneseq
    %v463 = vshrl.u32 %v462, 7
    %v464 = vsub.s32 0, %v463
    %v465 = vrot.slane %v431, %v464
    %v467 = vmul.f32 %v459, %v465
    %v468 = vmul.f32 %v460, %v465
    %v470 = vlaneseq
    %v471 = vshrl.u32 %v470, 7
    %v472 = vsub.s32 0, %v471
    %v473 = vrot.slane %v432, %v472
    %v475 = vadd.f32 %v467, %v473
    %v476 = vadd.f32 %v468, %v473
    %v477 = vld [vmem:[#allocation10] sm:$0x1]
    %v478 = vld [vmem:[#allocation11] sm:$0x1]
    %v480 = vlaneseq
    %v481 = vshrl.u32 %v480, 7
    %v482 = vsub.s32 0, %v481
    %v483 = vrot.slane %v477, %v482
    %v485 = vmul.f32 %v459, %v483
    %v486 = vmul.f32 %v460, %v483
    %v488 = vlaneseq
    %v489 = vshrl.u32 %v488, 7
    %v490 = vsub.s32 0, %v489
    %v491 = vrot.slane %v478, %v490
    %v493 = vadd.f32 %v485, %v491
    %v494 = vadd.f32 %v486, %v491
    %v495 = vpack.c.bf16 %v476, %v475
    %v496 = vld [vmem:[#allocation13] sm:$0xf]
    %v497 = vld [vmem:[#allocation13 + $0x4] sm:$0xf]
    %v498 = vld [vmem:[#allocation13 + $0x8] sm:$0xf]
    %v499 = vld [vmem:[#allocation13 + $0xc] sm:$0xf]
    %v504 = vunpack.c.l.b16 %v496
    %v505 = vunpack.c.l.b16 %v497
    %v506 = vunpack.c.l.b16 %v498
    %v507 = vunpack.c.l.b16 %v499
    %v508 = vpack.c.b16 %v505, %v504
    %v509 = vpack.c.b16 %v507, %v506
    %v513 = vsel %vm433, %v495, 0
    %515 = vmatprep.subr.bf16.mxu0 0
    %516 = vmatpush1.bf16.msra.mxu0 0
    %517 = vmatprep.subr.bf16.mxu0 0
    %518 = vmatpush1.bf16.msra.mxu0 0
    %519 = vmatprep.subr.bf16.mxu0 0
    %520 = vmatpush1.bf16.msra.mxu0 0
    %521 = vmatprep.subr.bf16.mxu0 0
    %522 = vmatpush1.bf16.msra.mxu0 0
    %523 = vmatprep.subr.bf16.mxu0 0
    %524 = vmatpush1.bf16.msra.mxu0 0
    %525 = vmatprep.subr.bf16.mxu0 0
    %526 = vmatpush1.bf16.msra.mxu0 0
    %527 = vmatprep.subr.bf16.mxu0 0
    %528 = vmatpush1.bf16.msra.mxu0 %v509
    %529 = vmatprep.subr.bf16.mxu0 0
    %530 = vmatpush1.bf16.msra.mxu0 %v508
    %531 = vmatprep.subr.bf16.mxu0 0
    %532 = vmatpush2.bf16.msra.mxu0 0
    %533 = vmatprep.subr.bf16.mxu0 0
    %534 = vmatpush2.bf16.msra.mxu0 0
    %535 = vmatprep.subr.bf16.mxu0 0
    %536 = vmatpush2.bf16.msra.mxu0 0
    %537 = vmatprep.subr.bf16.mxu0 0
    %538 = vmatpush2.bf16.msra.mxu0 0
    %539 = vmatprep.subr.bf16.mxu0 0
    %540 = vmatpush2.bf16.msra.mxu0 0
    %541 = vmatprep.subr.bf16.mxu0 0
    %542 = vmatpush2.bf16.msra.mxu0 0
    %543 = vmatprep.subr.bf16.mxu0 0
    %544 = vmatpush2.bf16.msra.mxu0 0
    %545 = vmatprep.subr.bf16.mxu0 0
    %546 = vmatpush2.bf16.msra.mxu0 0
    %547 = vmatprep.mubr.bf16.mxu0 0
    %548 = vmatmul.mubr.bf16.gmra.mxu0 %v513
    %v549 = vpop.f32.mrf.mxu0
    %v550 = vadd.f32 0.0, %v549
    %v551 = vpop.f32.mrf.mxu0
    %v552 = vpop.f32.mrf.mxu0
    %v553 = vadd.f32 0.0, %v552
    %v554 = vpop.f32.mrf.mxu0
    %555 = vdwg.mxu0
    %v556 = vlaneseq
    %v557 = vshrl.u32 %v556, 7
    %v558 = vlaneseq
    %v559 = vand.u32 %v558, 127
    %vm560 = vcmp.le.s32.totalorder %v559, %v557
    %v561 = vsel %vm560, 0.0, -3.4028235e+38
    %v562 = vcvt.s32.f32 %v559
    %v563 = vpack.c.bf16 %v550, %v550
    %v564 = vpack.c.bf16 %v553, %v553
    %v565 = vmul.f32 %v562, 0.25
    %567 = vrot.lane.b32.xlu0 %v563, 96
    %v568 = vpop.permute.xlu0 %567
    %vm569 = vcmask 64512
    %v571 = vsel %vm569, %v563, 0
    %v574 = vsel %vm569, %v568, 0
    %576 = vmatprep.subr.bf16.mxu0 0
    %577 = vmatpush1.bf16.xpose.msra.mxu0 0
    %578 = vmatprep.subr.bf16.mxu0 0
    %579 = vmatpush1.bf16.xpose.msra.mxu0 0
    %580 = vmatprep.subr.bf16.mxu0 0
    %581 = vmatpush1.bf16.xpose.msra.mxu0 0
    %582 = vmatprep.subr.bf16.mxu0 0
    %583 = vmatpush1.bf16.xpose.msra.mxu0 0
    %584 = vmatprep.subr.bf16.mxu0 0
    %585 = vmatpush1.bf16.xpose.msra.mxu0 0
    %586 = vmatprep.subr.bf16.mxu0 0
    %587 = vmatpush1.bf16.xpose.msra.mxu0 0
    %588 = vmatprep.subr.bf16.mxu0 0
    %589 = vmatpush1.bf16.xpose.msra.mxu0 0
    %590 = vmatprep.subr.bf16.mxu0 0
    %591 = vmatpush1.bf16.xpose.msra.mxu0 %v574
    %592 = vmatprep.subr.bf16.mxu0 0
    %593 = vmatpush2.bf16.xpose.msra.mxu0 0
    %594 = vmatprep.subr.bf16.mxu0 0
    %595 = vmatpush2.bf16.xpose.msra.mxu0 0
    %596 = vmatprep.subr.bf16.mxu0 0
    %597 = vmatpush2.bf16.xpose.msra.mxu0 0
    %598 = vmatprep.subr.bf16.mxu0 0
    %599 = vmatpush2.bf16.xpose.msra.mxu0 0
    %600 = vmatprep.subr.bf16.mxu0 0
    %601 = vmatpush2.bf16.xpose.msra.mxu0 0
    %602 = vmatprep.subr.bf16.mxu0 0
    %603 = vmatpush2.bf16.xpose.msra.mxu0 0
    %604 = vmatprep.subr.bf16.mxu0 0
    %605 = vmatpush2.bf16.xpose.msra.mxu0 0
    %606 = vmatprep.subr.bf16.mxu0 0
    %607 = vmatpush2.bf16.xpose.msra.mxu0 0
    %608 = vmatprep.mubr.bf16.mxu0 0
    %609 = vmatmul.mubr.bf16.gmra.mxu0 %v571
    %v610 = vpop.f32.mrf.mxu0
    %v611 = vadd.f32 %v565, %v610
    %v612 = vpop.f32.mrf.mxu0
    %v613 = vpop.f32.mrf.mxu0
    %v614 = vpop.f32.mrf.mxu0
    %615 = vdwg.mxu0
    %617 = vrot.lane.b32.xlu0 %v564, 96
    %v618 = vpop.permute.xlu0 %617
    %v620 = vsel %vm569, %v564, 0
    %v623 = vsel %vm569, %v618, 0
    %625 = vmatprep.subr.bf16.mxu0 0
    %626 = vmatpush1.bf16.xpose.msra.mxu0 0
    %627 = vmatprep.subr.bf16.mxu0 0
    %628 = vmatpush1.bf16.xpose.msra.mxu0 0
    %629 = vmatprep.subr.bf16.mxu0 0
    %630 = vmatpush1.bf16.xpose.msra.mxu0 0
    %631 = vmatprep.subr.bf16.mxu0 0
    %632 = vmatpush1.bf16.xpose.msra.mxu0 0
    %633 = vmatprep.subr.bf16.mxu0 0
    %634 = vmatpush1.bf16.xpose.msra.mxu0 0
    %635 = vmatprep.subr.bf16.mxu0 0
    %636 = vmatpush1.bf16.xpose.msra.mxu0 0
    %637 = vmatprep.subr.bf16.mxu0 0
    %638 = vmatpush1.bf16.xpose.msra.mxu0 0
    %639 = vmatprep.subr.bf16.mxu0 0
    %640 = vmatpush1.bf16.xpose.msra.mxu0 %v623
    %641 = vmatprep.subr.bf16.mxu0 0
    %642 = vmatpush2.bf16.xpose.msra.mxu0 0
    %643 = vmatprep.subr.bf16.mxu0 0
    %644 = vmatpush2.bf16.xpose.msra.mxu0 0
    %645 = vmatprep.subr.bf16.mxu0 0
    %646 = vmatpush2.bf16.xpose.msra.mxu0 0
    %647 = vmatprep.subr.bf16.mxu0 0
    %648 = vmatpush2.bf16.xpose.msra.mxu0 0
    %649 = vmatprep.subr.bf16.mxu0 0
    %650 = vmatpush2.bf16.xpose.msra.mxu0 0
    %651 = vmatprep.subr.bf16.mxu0 0
    %652 = vmatpush2.bf16.xpose.msra.mxu0 0
    %653 = vmatprep.subr.bf16.mxu0 0
    %654 = vmatpush2.bf16.xpose.msra.mxu0 0
    %655 = vmatprep.subr.bf16.mxu0 0
    %656 = vmatpush2.bf16.xpose.msra.mxu0 0
    %657 = vmatprep.mubr.bf16.mxu0 0
    %658 = vmatmul.mubr.bf16.gmra.mxu0 %v620
    %v659 = vpop.f32.mrf.mxu0
    %v660 = vadd.f32 %v565, %v659
    %v661 = vpop.f32.mrf.mxu0
    %v662 = vpop.f32.mrf.mxu0
    %v663 = vpop.f32.mrf.mxu0
    %664 = vdwg.mxu0
    %v665 = vmul.f32 %v611, 0.35355338
    %v666 = vmul.f32 %v660, 0.35355338
    %v667 = vadd.f32 %v665, %v561
    %v668 = vadd.f32 %v666, %v561
    %v669 = vsel %vm569, %v667, -inf
    %670 = vmax.xlane.f32.xlu0 %v669
    %v671 = vpop.xlane.xlu0 %670
    %v672 = vsel %vm569, %v668, -inf
    %673 = vmax.xlane.f32.xlu0 %v672
    %v674 = vpop.xlane.xlu0 %673
    %v675 = vsub.f32 %v667, %v671
    %v676 = vsub.f32 %v668, %v674
    %v677 = vmul.f32 %v675, 1.442695
    %v678 = vpow.pop %v677
    %v679 = vmul.f32 %v676, 1.442695
    %v680 = vpow.pop %v679
    %v681 = vsel %vm569, %v678, 0.0
    %682 = vadd.xlane.f32.xlu0 %v681
    %v683 = vpop.xlane.xlu0 %682
    %v684 = vsel %vm569, %v680, 0.0
    %685 = vadd.xlane.f32.xlu0 %v684
    %v686 = vpop.xlane.xlu0 %685
    %v687 = vrcp.pop %v683
    %v688 = vrcp.pop %v686
    %v689 = vmul.f32 %v678, %v687
    %v690 = vmul.f32 %v680, %v688
    %v691 = vpack.c.bf16 %v689, %v689
    %v692 = vpack.c.bf16 %v690, %v690
    %693 = vrot.lane.b32.xlu0 %v563, 64
    %v694 = vpop.permute.xlu0 %693
    %v696 = vsel %vm569, %v691, 0
    %vm698 = vcmask 1043456
    %v700 = vsel %vm698, %v694, 0
    %702 = vmatprep.subr.bf16.mxu0 0
    %703 = vmatpush1.bf16.msra.mxu0 0
    %704 = vmatprep.subr.bf16.mxu0 0
    %705 = vmatpush1.bf16.msra.mxu0 0
    %706 = vmatprep.subr.bf16.mxu0 0
    %707 = vmatpush1.bf16.msra.mxu0 0
    %708 = vmatprep.subr.bf16.mxu0 0
    %709 = vmatpush1.bf16.msra.mxu0 0
    %710 = vmatprep.subr.bf16.mxu0 0
    %711 = vmatpush1.bf16.msra.mxu0 0
    %712 = vmatprep.subr.bf16.mxu0 0
    %713 = vmatpush1.bf16.msra.mxu0 0
    %714 = vmatprep.subr.bf16.mxu0 0
    %715 = vmatpush1.bf16.msra.mxu0 0
    %716 = vmatprep.subr.bf16.mxu0 0
    %717 = vmatpush1.bf16.msra.mxu0 %v700
    %718 = vmatprep.subr.bf16.mxu0 0
    %719 = vmatpush2.bf16.msra.mxu0 0
    %720 = vmatprep.subr.bf16.mxu0 0
    %721 = vmatpush2.bf16.msra.mxu0 0
    %722 = vmatprep.subr.bf16.mxu0 0
    %723 = vmatpush2.bf16.msra.mxu0 0
    %724 = vmatprep.subr.bf16.mxu0 0
    %725 = vmatpush2.bf16.msra.mxu0 0
    %726 = vmatprep.subr.bf16.mxu0 0
    %727 = vmatpush2.bf16.msra.mxu0 0
    %728 = vmatprep.subr.bf16.mxu0 0
    %729 = vmatpush2.bf16.msra.mxu0 0
    %730 = vmatprep.subr.bf16.mxu0 0
    %731 = vmatpush2.bf16.msra.mxu0 0
    %732 = vmatprep.subr.bf16.mxu0 0
    %733 = vmatpush2.bf16.msra.mxu0 0
    %734 = vmatprep.mubr.bf16.mxu0 0
    %735 = vmatmul.mubr.bf16.gmra.mxu0 %v696
    %v736 = vpop.f32.mrf.mxu0
    %v737 = vadd.f32 0.0, %v736
    %v738 = vpop.f32.mrf.mxu0
    %v739 = vpop.f32.mrf.mxu0
    %v740 = vpop.f32.mrf.mxu0
    %741 = vdwg.mxu0
    %742 = vrot.lane.b32.xlu0 %v564, 64
    %v743 = vpop.permute.xlu0 %742
    %v745 = vsel %vm569, %v692, 0
    %v748 = vsel %vm698, %v743, 0
    %750 = vmatprep.subr.bf16.mxu0 0
    %751 = vmatpush1.bf16.msra.mxu0 0
    %752 = vmatprep.subr.bf16.mxu0 0
    %753 = vmatpush1.bf16.msra.mxu0 0
    %754 = vmatprep.subr.bf16.mxu0 0
    %755 = vmatpush1.bf16.msra.mxu0 0
    %756 = vmatprep.subr.bf16.mxu0 0
    %757 = vmatpush1.bf16.msra.mxu0 0
    %758 = vmatprep.subr.bf16.mxu0 0
    %759 = vmatpush1.bf16.msra.mxu0 0
    %760 = vmatprep.subr.bf16.mxu0 0
    %761 = vmatpush1.bf16.msra.mxu0 0
    %762 = vmatprep.subr.bf16.mxu0 0
    %763 = vmatpush1.bf16.msra.mxu0 0
    %764 = vmatprep.subr.bf16.mxu0 0
    %765 = vmatpush1.bf16.msra.mxu0 %v748
    %766 = vmatprep.subr.bf16.mxu0 0
    %767 = vmatpush2.bf16.msra.mxu0 0
    %768 = vmatprep.subr.bf16.mxu0 0
    %769 = vmatpush2.bf16.msra.mxu0 0
    %770 = vmatprep.subr.bf16.mxu0 0
    %771 = vmatpush2.bf16.msra.mxu0 0
    %772 = vmatprep.subr.bf16.mxu0 0
    %773 = vmatpush2.bf16.msra.mxu0 0
    %774 = vmatprep.subr.bf16.mxu0 0
    %775 = vmatpush2.bf16.msra.mxu0 0
    %776 = vmatprep.subr.bf16.mxu0 0
    %777 = vmatpush2.bf16.msra.mxu0 0
    %778 = vmatprep.subr.bf16.mxu0 0
    %779 = vmatpush2.bf16.msra.mxu0 0
    %780 = vmatprep.subr.bf16.mxu0 0
    %781 = vmatpush2.bf16.msra.mxu0 0
    %782 = vmatprep.mubr.bf16.mxu0 0
    %783 = vmatmul.mubr.bf16.gmra.mxu0 %v745
    %v784 = vpop.f32.mrf.mxu0
    %v785 = vadd.f32 0.0, %v784
    %v786 = vpop.f32.mrf.mxu0
    %v787 = vpop.f32.mrf.mxu0
    %v788 = vpop.f32.mrf.mxu0
    %789 = vdwg.mxu0
    %v790 = vmul.f32 %v562, 0.0625
    %791 = vrot.lane.b32.xlu0 %v563, 120
    %v792 = vpop.permute.xlu0 %791
    %793 = vrot.lane.b32.xlu0 %v563, 88
    %v794 = vpop.permute.xlu0 %793
    %v796 = vsel %vm569, %v792, 0
    %v799 = vsel %vm569, %v794, 0
    %801 = vmatprep.subr.bf16.mxu0 0
    %802 = vmatpush1.bf16.xpose.msra.mxu0 0
    %803 = vmatprep.subr.bf16.mxu0 0
    %804 = vmatpush1.bf16.xpose.msra.mxu0 0
    %805 = vmatprep.subr.bf16.mxu0 0
    %806 = vmatpush1.bf16.xpose.msra.mxu0 0
    %807 = vmatprep.subr.bf16.mxu0 0
    %808 = vmatpush1.bf16.xpose.msra.mxu0 0
    %809 = vmatprep.subr.bf16.mxu0 0
    %810 = vmatpush1.bf16.xpose.msra.mxu0 0
    %811 = vmatprep.subr.bf16.mxu0 0
    %812 = vmatpush1.bf16.xpose.msra.mxu0 0
    %813 = vmatprep.subr.bf16.mxu0 0
    %814 = vmatpush1.bf16.xpose.msra.mxu0 0
    %815 = vmatprep.subr.bf16.mxu0 0
    %816 = vmatpush1.bf16.xpose.msra.mxu0 %v799
    %817 = vmatprep.subr.bf16.mxu0 0
    %818 = vmatpush2.bf16.xpose.msra.mxu0 0
    %819 = vmatprep.subr.bf16.mxu0 0
    %820 = vmatpush2.bf16.xpose.msra.mxu0 0
    %821 = vmatprep.subr.bf16.mxu0 0
    %822 = vmatpush2.bf16.xpose.msra.mxu0 0
    %823 = vmatprep.subr.bf16.mxu0 0
    %824 = vmatpush2.bf16.xpose.msra.mxu0 0
    %825 = vmatprep.subr.bf16.mxu0 0
    %826 = vmatpush2.bf16.xpose.msra.mxu0 0
    %827 = vmatprep.subr.bf16.mxu0 0
    %828 = vmatpush2.bf16.xpose.msra.mxu0 0
    %829 = vmatprep.subr.bf16.mxu0 0
    %830 = vmatpush2.bf16.xpose.msra.mxu0 0
    %831 = vmatprep.subr.bf16.mxu0 0
    %832 = vmatpush2.bf16.xpose.msra.mxu0 0
    %833 = vmatprep.mubr.bf16.mxu0 0
    %834 = vmatmul.mubr.bf16.gmra.mxu0 %v796
    %v835 = vpop.f32.mrf.mxu0
    %v836 = vadd.f32 %v790, %v835
    %v837 = vpop.f32.mrf.mxu0
    %v838 = vpop.f32.mrf.mxu0
    %v839 = vpop.f32.mrf.mxu0
    %840 = vdwg.mxu0
    %841 = vrot.lane.b32.xlu0 %v564, 120
    %v842 = vpop.permute.xlu0 %841
    %843 = vrot.lane.b32.xlu0 %v564, 88
    %v844 = vpop.permute.xlu0 %843
    %v846 = vsel %vm569, %v842, 0
    %v849 = vsel %vm569, %v844, 0
    %851 = vmatprep.subr.bf16.mxu0 0
    %852 = vmatpush1.bf16.xpose.msra.mxu0 0
    %853 = vmatprep.subr.bf16.mxu0 0
    %854 = vmatpush1.bf16.xpose.msra.mxu0 0
    %855 = vmatprep.subr.bf16.mxu0 0
    %856 = vmatpush1.bf16.xpose.msra.mxu0 0
    %857 = vmatprep.subr.bf16.mxu0 0
    %858 = vmatpush1.bf16.xpose.msra.mxu0 0
    %859 = vmatprep.subr.bf16.mxu0 0
    %860 = vmatpush1.bf16.xpose.msra.mxu0 0
    %861 = vmatprep.subr.bf16.mxu0 0
    %862 = vmatpush1.bf16.xpose.msra.mxu0 0
    %863 = vmatprep.subr.bf16.mxu0 0
    %864 = vmatpush1.bf16.xpose.msra.mxu0 0
    %865 = vmatprep.subr.bf16.mxu0 0
    %866 = vmatpush1.bf16.xpose.msra.mxu0 %v849
    %867 = vmatprep.subr.bf16.mxu0 0
    %868 = vmatpush2.bf16.xpose.msra.mxu0 0
    %869 = vmatprep.subr.bf16.mxu0 0
    %870 = vmatpush2.bf16.xpose.msra.mxu0 0
    %871 = vmatprep.subr.bf16.mxu0 0
    %872 = vmatpush2.bf16.xpose.msra.mxu0 0
    %873 = vmatprep.subr.bf16.mxu0 0
    %874 = vmatpush2.bf16.xpose.msra.mxu0 0
    %875 = vmatprep.subr.bf16.mxu0 0
    %876 = vmatpush2.bf16.xpose.msra.mxu0 0
    %877 = vmatprep.subr.bf16.mxu0 0
    %878 = vmatpush2.bf16.xpose.msra.mxu0 0
    %879 = vmatprep.subr.bf16.mxu0 0
    %880 = vmatpush2.bf16.xpose.msra.mxu0 0
    %881 = vmatprep.subr.bf16.mxu0 0
    %882 = vmatpush2.bf16.xpose.msra.mxu0 0
    %883 = vmatprep.mubr.bf16.mxu0 0
    %884 = vmatmul.mubr.bf16.gmra.mxu0 %v846
    %v885 = vpop.f32.mrf.mxu0
    %v886 = vadd.f32 %v790, %v885
    %v887 = vpop.f32.mrf.mxu0
    %v888 = vpop.f32.mrf.mxu0
    %v889 = vpop.f32.mrf.mxu0
    %890 = vdwg.mxu0
    %v891 = vmul.f32 %v836, 0.35355338
    %v892 = vmul.f32 %v886, 0.35355338
    %v893 = vadd.f32 %v891, %v561
    %v894 = vadd.f32 %v892, %v561
    %v895 = vsel %vm569, %v893, -inf
    %896 = vmax.xlane.f32.xlu0 %v895
    %v897 = vpop.xlane.xlu0 %896
    %v898 = vsel %vm569, %v894, -inf
    %899 = vmax.xlane.f32.xlu0 %v898
    %v900 = vpop.xlane.xlu0 %899
    %v901 = vsub.f32 %v893, %v897
    %v902 = vsub.f32 %v894, %v900
    %v903 = vmul.f32 %v901, 1.442695
    %v904 = vpow.pop %v903
    %v905 = vmul.f32 %v902, 1.442695
    %v906 = vpow.pop %v905
    %v907 = vsel %vm569, %v904, 0.0
    %908 = vadd.xlane.f32.xlu0 %v907
    %v909 = vpop.xlane.xlu0 %908
    %v910 = vsel %vm569, %v906, 0.0
    %911 = vadd.xlane.f32.xlu0 %v910
    %v912 = vpop.xlane.xlu0 %911
    %v913 = vrcp.pop %v909
    %v914 = vrcp.pop %v912
    %v915 = vmul.f32 %v904, %v913
    %v916 = vmul.f32 %v906, %v914
    %v917 = vpack.c.bf16 %v915, %v915
    %v918 = vpack.c.bf16 %v916, %v916
    %919 = vrot.lane.b32.xlu0 %v563, 56
    %v920 = vpop.permute.xlu0 %919
    %v922 = vsel %vm569, %v917, 0
    %v925 = vsel %vm698, %v920, 0
    %927 = vmatprep.subr.bf16.mxu0 0
    %928 = vmatpush1.bf16.msra.mxu0 0
    %929 = vmatprep.subr.bf16.mxu0 0
    %930 = vmatpush1.bf16.msra.mxu0 0
    %931 = vmatprep.subr.bf16.mxu0 0
    %932 = vmatpush1.bf16.msra.mxu0 0
    %933 = vmatprep.subr.bf16.mxu0 0
    %934 = vmatpush1.bf16.msra.mxu0 0
    %935 = vmatprep.subr.bf16.mxu0 0
    %936 = vmatpush1.bf16.msra.mxu0 0
    %937 = vmatprep.subr.bf16.mxu0 0
    %938 = vmatpush1.bf16.msra.mxu0 0
    %939 = vmatprep.subr.bf16.mxu0 0
    %940 = vmatpush1.bf16.msra.mxu0 0
    %941 = vmatprep.subr.bf16.mxu0 0
    %942 = vmatpush1.bf16.msra.mxu0 %v925
    %943 = vmatprep.subr.bf16.mxu0 0
    %944 = vmatpush2.bf16.msra.mxu0 0
    %945 = vmatprep.subr.bf16.mxu0 0
    %946 = vmatpush2.bf16.msra.mxu0 0
    %947 = vmatprep.subr.bf16.mxu0 0
    %948 = vmatpush2.bf16.msra.mxu0 0
    %949 = vmatprep.subr.bf16.mxu0 0
    %950 = vmatpush2.bf16.msra.mxu0 0
    %951 = vmatprep.subr.bf16.mxu0 0
    %952 = vmatpush2.bf16.msra.mxu0 0
    %953 = vmatprep.subr.bf16.mxu0 0
    %954 = vmatpush2.bf16.msra.mxu0 0
    %955 = vmatprep.subr.bf16.mxu0 0
    %956 = vmatpush2.bf16.msra.mxu0 0
    %957 = vmatprep.subr.bf16.mxu0 0
    %958 = vmatpush2.bf16.msra.mxu0 0
    %959 = vmatprep.mubr.bf16.mxu0 0
    %960 = vmatmul.mubr.bf16.gmra.mxu0 %v922
    %v961 = vpop.f32.mrf.mxu0
    %v962 = vadd.f32 0.0, %v961
    %v963 = vpop.f32.mrf.mxu0
    %v964 = vpop.f32.mrf.mxu0
    %v965 = vpop.f32.mrf.mxu0
    %966 = vdwg.mxu0
    %967 = vrot.lane.b32.xlu0 %v564, 56
    %v968 = vpop.permute.xlu0 %967
    %v970 = vsel %vm569, %v918, 0
    %v973 = vsel %vm698, %v968, 0
    %975 = vmatprep.subr.bf16.mxu0 0
    %976 = vmatpush1.bf16.msra.mxu0 0
    %977 = vmatprep.subr.bf16.mxu0 0
    %978 = vmatpush1.bf16.msra.mxu0 0
    %979 = vmatprep.subr.bf16.mxu0 0
    %980 = vmatpush1.bf16.msra.mxu0 0
    %981 = vmatprep.subr.bf16.mxu0 0
    %982 = vmatpush1.bf16.msra.mxu0 0
    %983 = vmatprep.subr.bf16.mxu0 0
    %984 = vmatpush1.bf16.msra.mxu0 0
    %985 = vmatprep.subr.bf16.mxu0 0
    %986 = vmatpush1.bf16.msra.mxu0 0
    %987 = vmatprep.subr.bf16.mxu0 0
    %988 = vmatpush1.bf16.msra.mxu0 0
    %989 = vmatprep.subr.bf16.mxu0 0
    %990 = vmatpush1.bf16.msra.mxu0 %v973
    %991 = vmatprep.subr.bf16.mxu0 0
    %992 = vmatpush2.bf16.msra.mxu0 0
    %993 = vmatprep.subr.bf16.mxu0 0
    %994 = vmatpush2.bf16.msra.mxu0 0
    %995 = vmatprep.subr.bf16.mxu0 0
    %996 = vmatpush2.bf16.msra.mxu0 0
    %997 = vmatprep.subr.bf16.mxu0 0
    %998 = vmatpush2.bf16.msra.mxu0 0
    %999 = vmatprep.subr.bf16.mxu0 0
    %1000 = vmatpush2.bf16.msra.mxu0 0
    %1001 = vmatprep.subr.bf16.mxu0 0
    %1002 = vmatpush2.bf16.msra.mxu0 0
    %1003 = vmatprep.subr.bf16.mxu0 0
    %1004 = vmatpush2.bf16.msra.mxu0 0
    %1005 = vmatprep.subr.bf16.mxu0 0
    %1006 = vmatpush2.bf16.msra.mxu0 0
    %1007 = vmatprep.mubr.bf16.mxu0 0
    %1008 = vmatmul.mubr.bf16.gmra.mxu0 %v970
    %v1009 = vpop.f32.mrf.mxu0
    %v1010 = vadd.f32 0.0, %v1009
    %v1011 = vpop.f32.mrf.mxu0
    %v1012 = vpop.f32.mrf.mxu0
    %v1013 = vpop.f32.mrf.mxu0
    %1014 = vdwg.mxu0
    %v1015 = vmul.f32 %v562, 0.015625
    %1016 = vrot.lane.b32.xlu0 %v563, 112
    %v1017 = vpop.permute.xlu0 %1016
    %1018 = vrot.lane.b32.xlu0 %v563, 80
    %v1019 = vpop.permute.xlu0 %1018
    %v1021 = vsel %vm569, %v1017, 0
    %v1024 = vsel %vm569, %v1019, 0
    %1026 = vmatprep.subr.bf16.mxu0 0
    %1027 = vmatpush1.bf16.xpose.msra.mxu0 0
    %1028 = vmatprep.subr.bf16.mxu0 0
    %1029 = vmatpush1.bf16.xpose.msra.mxu0 0
    %1030 = vmatprep.subr.bf16.mxu0 0
    %1031 = vmatpush1.bf16.xpose.msra.mxu0 0
    %1032 = vmatprep.subr.bf16.mxu0 0
    %1033 = vmatpush1.bf16.xpose.msra.mxu0 0
    %1034 = vmatprep.subr.bf16.mxu0 0
    %1035 = vmatpush1.bf16.xpose.msra.mxu0 0
    %1036 = vmatprep.subr.bf16.mxu0 0
    %1037 = vmatpush1.bf16.xpose.msra.mxu0 0
    %1038 = vmatprep.subr.bf16.mxu0 0
    %1039 = vmatpush1.bf16.xpose.msra.mxu0 0
    %1040 = vmatprep.subr.bf16.mxu0 0
    %1041 = vmatpush1.bf16.xpose.msra.mxu0 %v1024
    %1042 = vmatprep.subr.bf16.mxu0 0
    %1043 = vmatpush2.bf16.xpose.msra.mxu0 0
    %1044 = vmatprep.subr.bf16.mxu0 0
    %1045 = vmatpush2.bf16.xpose.msra.mxu0 0
    %1046 = vmatprep.subr.bf16.mxu0 0
    %1047 = vmatpush2.bf16.xpose.msra.mxu0 0
    %1048 = vmatprep.subr.bf16.mxu0 0
    %1049 = vmatpush2.bf16.xpose.msra.mxu0 0
    %1050 = vmatprep.subr.bf16.mxu0 0
    %1051 = vmatpush2.bf16.xpose.msra.mxu0 0
    %1052 = vmatprep.subr.bf16.mxu0 0
    %1053 = vmatpush2.bf16.xpose.msra.mxu0 0
    %1054 = vmatprep.subr.bf16.mxu0 0
    %1055 = vmatpush2.bf16.xpose.msra.mxu0 0
    %1056 = vmatprep.subr.bf16.mxu0 0
    %1057 = vmatpush2.bf16.xpose.msra.mxu0 0
    %1058 = vmatprep.mubr.bf16.mxu0 0
    %1059 = vmatmul.mubr.bf16.gmra.mxu0 %v1021
    %v1060 = vpop.f32.mrf.mxu0
    %v1061 = vadd.f32 %v1015, %v1060
    %v1062 = vpop.f32.mrf.mxu0
    %v1063 = vpop.f32.mrf.mxu0
    %v1064 = vpop.f32.mrf.mxu0
    %1065 = vdwg.mxu0
    %1066 = vrot.lane.b32.xlu0 %v564, 112
    %v1067 = vpop.permute.xlu0 %1066
    %1068 = vrot.lane.b32.xlu0 %v564, 80
    %v1069 = vpop.permute.xlu0 %1068
    %v1071 = vsel %vm569, %v1067, 0
    %v1074 = vsel %vm569, %v1069, 0
    %1076 = vmatprep.subr.bf16.mxu0 0
    %1077 = vmatpush1.bf16.xpose.msra.mxu0 0
    %1078 = vmatprep.subr.bf16.mxu0 0
    %1079 = vmatpush1.bf16.xpose.msra.mxu0 0
    %1080 = vmatprep.subr.bf16.mxu0 0
    %1081 = vmatpush1.bf16.xpose.msra.mxu0 0
    %1082 = vmatprep.subr.bf16.mxu0 0
    %1083 = vmatpush1.bf16.xpose.msra.mxu0 0
    %1084 = vmatprep.subr.bf16.mxu0 0
    %1085 = vmatpush1.bf16.xpose.msra.mxu0 0
    %1086 = vmatprep.subr.bf16.mxu0 0
    %1087 = vmatpush1.bf16.xpose.msra.mxu0 0
    %1088 = vmatprep.subr.bf16.mxu0 0
    %1089 = vmatpush1.bf16.xpose.msra.mxu0 0
    %1090 = vmatprep.subr.bf16.mxu0 0
    %1091 = vmatpush1.bf16.xpose.msra.mxu0 %v1074
    %1092 = vmatprep.subr.bf16.mxu0 0
    %1093 = vmatpush2.bf16.xpose.msra.mxu0 0
    %1094 = vmatprep.subr.bf16.mxu0 0
    %1095 = vmatpush2.bf16.xpose.msra.mxu0 0
    %1096 = vmatprep.subr.bf16.mxu0 0
    %1097 = vmatpush2.bf16.xpose.msra.mxu0 0
    %1098 = vmatprep.subr.bf16.mxu0 0
    %1099 = vmatpush2.bf16.xpose.msra.mxu0 0
    %1100 = vmatprep.subr.bf16.mxu0 0
    %1101 = vmatpush2.bf16.xpose.msra.mxu0 0
    %1102 = vmatprep.subr.bf16.mxu0 0
    %1103 = vmatpush2.bf16.xpose.msra.mxu0 0
    %1104 = vmatprep.subr.bf16.mxu0 0
    %1105 = vmatpush2.bf16.xpose.msra.mxu0 0
    %1106 = vmatprep.subr.bf16.mxu0 0
    %1107 = vmatpush2.bf16.xpose.msra.mxu0 0
    %1108 = vmatprep.mubr.bf16.mxu0 0
    %1109 = vmatmul.mubr.bf16.gmra.mxu0 %v1071
    %v1110 = vpop.f32.mrf.mxu0
    %v1111 = vadd.f32 %v1015, %v1110
    %v1112 = vpop.f32.mrf.mxu0
    %v1113 = vpop.f32.mrf.mxu0
    %v1114 = vpop.f32.mrf.mxu0
    %1115 = vdwg.mxu0
    %v1116 = vmul.f32 %v1061, 0.35355338
    %v1117 = vmul.f32 %v1111, 0.35355338
    %v1118 = vadd.f32 %v1116, %v561
    %v1119 = vadd.f32 %v1117, %v561
    %v1120 = vsel %vm569, %v1118, -inf
    %1121 = vmax.xlane.f32.xlu0 %v1120
    %v1122 = vpop.xlane.xlu0 %1121
    %v1123 = vsel %vm569, %v1119, -inf
    %1124 = vmax.xlane.f32.xlu0 %v1123
    %v1125 = vpop.xlane.xlu0 %1124
    %v1126 = vsub.f32 %v1118, %v1122
    %v1127 = vsub.f32 %v1119, %v1125
    %v1128 = vmul.f32 %v1126, 1.442695
    %v1129 = vpow.pop %v1128
    %v1130 = vmul.f32 %v1127, 1.442695
    %v1131 = vpow.pop %v1130
    %v1132 = vsel %vm569, %v1129, 0.0
    %1133 = vadd.xlane.f32.xlu0 %v1132
    %v1134 = vpop.xlane.xlu0 %1133
    %v1135 = vsel %vm569, %v1131, 0.0
    %1136 = vadd.xlane.f32.xlu0 %v1135
    %v1137 = vpop.xlane.xlu0 %1136
    %v1138 = vrcp.pop %v1134
    %v1139 = vrcp.pop %v1137
    %v1140 = vmul.f32 %v1129, %v1138
    %v1141 = vmul.f32 %v1131, %v1139
    %v1142 = vpack.c.bf16 %v1140, %v1140
    %v1143 = vpack.c.bf16 %v1141, %v1141
    %1144 = vrot.lane.b32.xlu0 %v563, 48
    %v1145 = vpop.permute.xlu0 %1144
    %v1147 = vsel %vm569, %v1142, 0
    %v1150 = vsel %vm698, %v1145, 0
    %1152 = vmatprep.subr.bf16.mxu0 0
    %1153 = vmatpush1.bf16.msra.mxu0 0
    %1154 = vmatprep.subr.bf16.mxu0 0
    %1155 = vmatpush1.bf16.msra.mxu0 0
    %1156 = vmatprep.subr.bf16.mxu0 0
    %1157 = vmatpush1.bf16.msra.mxu0 0
    %1158 = vmatprep.subr.bf16.mxu0 0
    %1159 = vmatpush1.bf16.msra.mxu0 0
    %1160 = vmatprep.subr.bf16.mxu0 0
    %1161 = vmatpush1.bf16.msra.mxu0 0
    %1162 = vmatprep.subr.bf16.mxu0 0
    %1163 = vmatpush1.bf16.msra.mxu0 0
    %1164 = vmatprep.subr.bf16.mxu0 0
    %1165 = vmatpush1.bf16.msra.mxu0 0
    %1166 = vmatprep.subr.bf16.mxu0 0
    %1167 = vmatpush1.bf16.msra.mxu0 %v1150
    %1168 = vmatprep.subr.bf16.mxu0 0
    %1169 = vmatpush2.bf16.msra.mxu0 0
    %1170 = vmatprep.subr.bf16.mxu0 0
    %1171 = vmatpush2.bf16.msra.mxu0 0
    %1172 = vmatprep.subr.bf16.mxu0 0
    %1173 = vmatpush2.bf16.msra.mxu0 0
    %1174 = vmatprep.subr.bf16.mxu0 0
    %1175 = vmatpush2.bf16.msra.mxu0 0
    %1176 = vmatprep.subr.bf16.mxu0 0
    %1177 = vmatpush2.bf16.msra.mxu0 0
    %1178 = vmatprep.subr.bf16.mxu0 0
    %1179 = vmatpush2.bf16.msra.mxu0 0
    %1180 = vmatprep.subr.bf16.mxu0 0
    %1181 = vmatpush2.bf16.msra.mxu0 0
    %1182 = vmatprep.subr.bf16.mxu0 0
    %1183 = vmatpush2.bf16.msra.mxu0 0
    %1184 = vmatprep.mubr.bf16.mxu0 0
    %1185 = vmatmul.mubr.bf16.gmra.mxu0 %v1147
    %v1186 = vpop.f32.mrf.mxu0
    %v1187 = vadd.f32 0.0, %v1186
    %v1188 = vpop.f32.mrf.mxu0
    %v1189 = vpop.f32.mrf.mxu0
    %v1190 = vpop.f32.mrf.mxu0
    %1191 = vdwg.mxu0
    %1192 = vrot.lane.b32.xlu0 %v564, 48
    %v1193 = vpop.permute.xlu0 %1192
    %v1195 = vsel %vm569, %v1143, 0
    %v1198 = vsel %vm698, %v1193, 0
    %1200 = vmatprep.subr.bf16.mxu0 0
    %1201 = vmatpush1.bf16.msra.mxu0 0
    %1202 = vmatprep.subr.bf16.mxu0 0
    %1203 = vmatpush1.bf16.msra.mxu0 0
    %1204 = vmatprep.subr.bf16.mxu0 0
    %1205 = vmatpush1.bf16.msra.mxu0 0
    %1206 = vmatprep.subr.bf16.mxu0 0
    %1207 = vmatpush1.bf16.msra.mxu0 0
    %1208 = vmatprep.subr.bf16.mxu0 0
    %1209 = vmatpush1.bf16.msra.mxu0 0
    %1210 = vmatprep.subr.bf16.mxu0 0
    %1211 = vmatpush1.bf16.msra.mxu0 0
    %1212 = vmatprep.subr.bf16.mxu0 0
    %1213 = vmatpush1.bf16.msra.mxu0 0
    %1214 = vmatprep.subr.bf16.mxu0 0
    %1215 = vmatpush1.bf16.msra.mxu0 %v1198
    %1216 = vmatprep.subr.bf16.mxu0 0
    %1217 = vmatpush2.bf16.msra.mxu0 0
    %1218 = vmatprep.subr.bf16.mxu0 0
    %1219 = vmatpush2.bf16.msra.mxu0 0
    %1220 = vmatprep.subr.bf16.mxu0 0
    %1221 = vmatpush2.bf16.msra.mxu0 0
    %1222 = vmatprep.subr.bf16.mxu0 0
    %1223 = vmatpush2.bf16.msra.mxu0 0
    %1224 = vmatprep.subr.bf16.mxu0 0
    %1225 = vmatpush2.bf16.msra.mxu0 0
    %1226 = vmatprep.subr.bf16.mxu0 0
    %1227 = vmatpush2.bf16.msra.mxu0 0
    %1228 = vmatprep.subr.bf16.mxu0 0
    %1229 = vmatpush2.bf16.msra.mxu0 0
    %1230 = vmatprep.subr.bf16.mxu0 0
    %1231 = vmatpush2.bf16.msra.mxu0 0
    %1232 = vmatprep.mubr.bf16.mxu0 0
    %1233 = vmatmul.mubr.bf16.gmra.mxu0 %v1195
    %v1234 = vpop.f32.mrf.mxu0
    %v1235 = vadd.f32 0.0, %v1234
    %v1236 = vpop.f32.mrf.mxu0
    %v1237 = vpop.f32.mrf.mxu0
    %v1238 = vpop.f32.mrf.mxu0
    %1239 = vdwg.mxu0
    %v1240 = vmul.f32 %v562, 0.00390625
    %1241 = vrot.lane.b32.xlu0 %v563, 104
    %v1242 = vpop.permute.xlu0 %1241
    %1243 = vrot.lane.b32.xlu0 %v563, 72
    %v1244 = vpop.permute.xlu0 %1243
    %v1246 = vsel %vm569, %v1242, 0
    %v1249 = vsel %vm569, %v1244, 0
    %1251 = vmatprep.subr.bf16.mxu0 0
    %1252 = vmatpush1.bf16.xpose.msra.mxu0 0
    %1253 = vmatprep.subr.bf16.mxu0 0
    %1254 = vmatpush1.bf16.xpose.msra.mxu0 0
    %1255 = vmatprep.subr.bf16.mxu0 0
    %1256 = vmatpush1.bf16.xpose.msra.mxu0 0
    %1257 = vmatprep.subr.bf16.mxu0 0
    %1258 = vmatpush1.bf16.xpose.msra.mxu0 0
    %1259 = vmatprep.subr.bf16.mxu0 0
    %1260 = vmatpush1.bf16.xpose.msra.mxu0 0
    %1261 = vmatprep.subr.bf16.mxu0 0
    %1262 = vmatpush1.bf16.xpose.msra.mxu0 0
    %1263 = vmatprep.subr.bf16.mxu0 0
    %1264 = vmatpush1.bf16.xpose.msra.mxu0 0
    %1265 = vmatprep.subr.bf16.mxu0 0
    %1266 = vmatpush1.bf16.xpose.msra.mxu0 %v1249
    %1267 = vmatprep.subr.bf16.mxu0 0
    %1268 = vmatpush2.bf16.xpose.msra.mxu0 0
    %1269 = vmatprep.subr.bf16.mxu0 0
    %1270 = vmatpush2.bf16.xpose.msra.mxu0 0
    %1271 = vmatprep.subr.bf16.mxu0 0
    %1272 = vmatpush2.bf16.xpose.msra.mxu0 0
    %1273 = vmatprep.subr.bf16.mxu0 0
    %1274 = vmatpush2.bf16.xpose.msra.mxu0 0
    %1275 = vmatprep.subr.bf16.mxu0 0
    %1276 = vmatpush2.bf16.xpose.msra.mxu0 0
    %1277 = vmatprep.subr.bf16.mxu0 0
    %1278 = vmatpush2.bf16.xpose.msra.mxu0 0
    %1279 = vmatprep.subr.bf16.mxu0 0
    %1280 = vmatpush2.bf16.xpose.msra.mxu0 0
    %1281 = vmatprep.subr.bf16.mxu0 0
    %1282 = vmatpush2.bf16.xpose.msra.mxu0 0
    %1283 = vmatprep.mubr.bf16.mxu0 0
    %1284 = vmatmul.mubr.bf16.gmra.mxu0 %v1246
    %v1285 = vpop.f32.mrf.mxu0
    %v1286 = vadd.f32 %v1240, %v1285
    %v1287 = vpop.f32.mrf.mxu0
    %v1288 = vpop.f32.mrf.mxu0
    %v1289 = vpop.f32.mrf.mxu0
    %1290 = vdwg.mxu0
    %1291 = vrot.lane.b32.xlu0 %v564, 104
    %v1292 = vpop.permute.xlu0 %1291
    %1293 = vrot.lane.b32.xlu0 %v564, 72
    %v1294 = vpop.permute.xlu0 %1293
    %v1296 = vsel %vm569, %v1292, 0
    %v1299 = vsel %vm569, %v1294, 0
    %1301 = vmatprep.subr.bf16.mxu0 0
    %1302 = vmatpush1.bf16.xpose.msra.mxu0 0
    %1303 = vmatprep.subr.bf16.mxu0 0
    %1304 = vmatpush1.bf16.xpose.msra.mxu0 0
    %1305 = vmatprep.subr.bf16.mxu0 0
    %1306 = vmatpush1.bf16.xpose.msra.mxu0 0
    %1307 = vmatprep.subr.bf16.mxu0 0
    %1308 = vmatpush1.bf16.xpose.msra.mxu0 0
    %1309 = vmatprep.subr.bf16.mxu0 0
    %1310 = vmatpush1.bf16.xpose.msra.mxu0 0
    %1311 = vmatprep.subr.bf16.mxu0 0
    %1312 = vmatpush1.bf16.xpose.msra.mxu0 0
    %1313 = vmatprep.subr.bf16.mxu0 0
    %1314 = vmatpush1.bf16.xpose.msra.mxu0 0
    %1315 = vmatprep.subr.bf16.mxu0 0
    %1316 = vmatpush1.bf16.xpose.msra.mxu0 %v1299
    %1317 = vmatprep.subr.bf16.mxu0 0
    %1318 = vmatpush2.bf16.xpose.msra.mxu0 0
    %1319 = vmatprep.subr.bf16.mxu0 0
    %1320 = vmatpush2.bf16.xpose.msra.mxu0 0
    %1321 = vmatprep.subr.bf16.mxu0 0
    %1322 = vmatpush2.bf16.xpose.msra.mxu0 0
    %1323 = vmatprep.subr.bf16.mxu0 0
    %1324 = vmatpush2.bf16.xpose.msra.mxu0 0
    %1325 = vmatprep.subr.bf16.mxu0 0
    %1326 = vmatpush2.bf16.xpose.msra.mxu0 0
    %1327 = vmatprep.subr.bf16.mxu0 0
    %1328 = vmatpush2.bf16.xpose.msra.mxu0 0
    %1329 = vmatprep.subr.bf16.mxu0 0
    %1330 = vmatpush2.bf16.xpose.msra.mxu0 0
    %1331 = vmatprep.subr.bf16.mxu0 0
    %1332 = vmatpush2.bf16.xpose.msra.mxu0 0
    %1333 = vmatprep.mubr.bf16.mxu0 0
    %1334 = vmatmul.mubr.bf16.gmra.mxu0 %v1296
    %v1335 = vpop.f32.mrf.mxu0
    %v1336 = vadd.f32 %v1240, %v1335
    %v1337 = vpop.f32.mrf.mxu0
    %v1338 = vpop.f32.mrf.mxu0
    %v1339 = vpop.f32.mrf.mxu0
    %1340 = vdwg.mxu0
    %v1341 = vmul.f32 %v1286, 0.35355338
    %v1342 = vmul.f32 %v1336, 0.35355338
    %v1343 = vadd.f32 %v1341, %v561
    %v1344 = vadd.f32 %v1342, %v561
    %v1345 = vsel %vm569, %v1343, -inf
    %1346 = vmax.xlane.f32.xlu0 %v1345
    %v1347 = vpop.xlane.xlu0 %1346
    %v1348 = vsel %vm569, %v1344, -inf
    %1349 = vmax.xlane.f32.xlu0 %v1348
    %v1350 = vpop.xlane.xlu0 %1349
    %v1351 = vsub.f32 %v1343, %v1347
    %v1352 = vsub.f32 %v1344, %v1350
    %v1353 = vmul.f32 %v1351, 1.442695
    %v1354 = vpow.pop %v1353
    %v1355 = vmul.f32 %v1352, 1.442695
    %v1356 = vpow.pop %v1355
    %v1357 = vsel %vm569, %v1354, 0.0
    %1358 = vadd.xlane.f32.xlu0 %v1357
    %v1359 = vpop.xlane.xlu0 %1358
    %v1360 = vsel %vm569, %v1356, 0.0
    %1361 = vadd.xlane.f32.xlu0 %v1360
    %v1362 = vpop.xlane.xlu0 %1361
    %v1363 = vrcp.pop %v1359
    %v1364 = vrcp.pop %v1362
    %v1365 = vmul.f32 %v1354, %v1363
    %v1366 = vmul.f32 %v1356, %v1364
    %v1367 = vpack.c.bf16 %v1365, %v1365
    %v1368 = vpack.c.bf16 %v1366, %v1366
    %1369 = vrot.lane.b32.xlu0 %v563, 40
    %v1370 = vpop.permute.xlu0 %1369
    %v1372 = vsel %vm569, %v1367, 0
    %v1375 = vsel %vm698, %v1370, 0
    %1377 = vmatprep.subr.bf16.mxu0 0
    %1378 = vmatpush1.bf16.msra.mxu0 0
    %1379 = vmatprep.subr.bf16.mxu0 0
    %1380 = vmatpush1.bf16.msra.mxu0 0
    %1381 = vmatprep.subr.bf16.mxu0 0
    %1382 = vmatpush1.bf16.msra.mxu0 0
    %1383 = vmatprep.subr.bf16.mxu0 0
    %1384 = vmatpush1.bf16.msra.mxu0 0
    %1385 = vmatprep.subr.bf16.mxu0 0
    %1386 = vmatpush1.bf16.msra.mxu0 0
    %1387 = vmatprep.subr.bf16.mxu0 0
    %1388 = vmatpush1.bf16.msra.mxu0 0
    %1389 = vmatprep.subr.bf16.mxu0 0
    %1390 = vmatpush1.bf16.msra.mxu0 0
    %1391 = vmatprep.subr.bf16.mxu0 0
    %1392 = vmatpush1.bf16.msra.mxu0 %v1375
    %1393 = vmatprep.subr.bf16.mxu0 0
    %1394 = vmatpush2.bf16.msra.mxu0 0
    %1395 = vmatprep.subr.bf16.mxu0 0
    %1396 = vmatpush2.bf16.msra.mxu0 0
    %1397 = vmatprep.subr.bf16.mxu0 0
    %1398 = vmatpush2.bf16.msra.mxu0 0
    %1399 = vmatprep.subr.bf16.mxu0 0
    %1400 = vmatpush2.bf16.msra.mxu0 0
    %1401 = vmatprep.subr.bf16.mxu0 0
    %1402 = vmatpush2.bf16.msra.mxu0 0
    %1403 = vmatprep.subr.bf16.mxu0 0
    %1404 = vmatpush2.bf16.msra.mxu0 0
    %1405 = vmatprep.subr.bf16.mxu0 0
    %1406 = vmatpush2.bf16.msra.mxu0 0
    %1407 = vmatprep.subr.bf16.mxu0 0
    %1408 = vmatpush2.bf16.msra.mxu0 0
    %1409 = vmatprep.mubr.bf16.mxu0 0
    %1410 = vmatmul.mubr.bf16.gmra.mxu0 %v1372
    %v1411 = vpop.f32.mrf.mxu0
    %v1412 = vadd.f32 0.0, %v1411
    %v1413 = vpop.f32.mrf.mxu0
    %v1414 = vpop.f32.mrf.mxu0
    %v1415 = vpop.f32.mrf.mxu0
    %1416 = vdwg.mxu0
    %1417 = vrot.lane.b32.xlu0 %v564, 40
    %v1418 = vpop.permute.xlu0 %1417
    %v1420 = vsel %vm569, %v1368, 0
    %v1423 = vsel %vm698, %v1418, 0
    %1425 = vmatprep.subr.bf16.mxu0 0
    %1426 = vmatpush1.bf16.msra.mxu0 0
    %1427 = vmatprep.subr.bf16.mxu0 0
    %1428 = vmatpush1.bf16.msra.mxu0 0
    %1429 = vmatprep.subr.bf16.mxu0 0
    %1430 = vmatpush1.bf16.msra.mxu0 0
    %1431 = vmatprep.subr.bf16.mxu0 0
    %1432 = vmatpush1.bf16.msra.mxu0 0
    %1433 = vmatprep.subr.bf16.mxu0 0
    %1434 = vmatpush1.bf16.msra.mxu0 0
    %1435 = vmatprep.subr.bf16.mxu0 0
    %1436 = vmatpush1.bf16.msra.mxu0 0
    %1437 = vmatprep.subr.bf16.mxu0 0
    %1438 = vmatpush1.bf16.msra.mxu0 0
    %1439 = vmatprep.subr.bf16.mxu0 0
    %1440 = vmatpush1.bf16.msra.mxu0 %v1423
    %1441 = vmatprep.subr.bf16.mxu0 0
    %1442 = vmatpush2.bf16.msra.mxu0 0
    %1443 = vmatprep.subr.bf16.mxu0 0
    %1444 = vmatpush2.bf16.msra.mxu0 0
    %1445 = vmatprep.subr.bf16.mxu0 0
    %1446 = vmatpush2.bf16.msra.mxu0 0
    %1447 = vmatprep.subr.bf16.mxu0 0
    %1448 = vmatpush2.bf16.msra.mxu0 0
    %1449 = vmatprep.subr.bf16.mxu0 0
    %1450 = vmatpush2.bf16.msra.mxu0 0
    %1451 = vmatprep.subr.bf16.mxu0 0
    %1452 = vmatpush2.bf16.msra.mxu0 0
    %1453 = vmatprep.subr.bf16.mxu0 0
    %1454 = vmatpush2.bf16.msra.mxu0 0
    %1455 = vmatprep.subr.bf16.mxu0 0
    %1456 = vmatpush2.bf16.msra.mxu0 0
    %1457 = vmatprep.mubr.bf16.mxu0 0
    %1458 = vmatmul.mubr.bf16.gmra.mxu0 %v1420
    %v1459 = vpop.f32.mrf.mxu0
    %v1460 = vadd.f32 0.0, %v1459
    %v1461 = vpop.f32.mrf.mxu0
    %v1462 = vpop.f32.mrf.mxu0
    %v1463 = vpop.f32.mrf.mxu0
    %1464 = vdwg.mxu0
    %1467 = vrot.lane.b32.xlu0 %v962, 8
    %v1468 = vpop.permute.xlu0 %1467
    %1469 = vrot.lane.b32.xlu0 %v1010, 8
    %v1470 = vpop.permute.xlu0 %1469
    %1475 = vrot.lane.b32.xlu0 %v1187, 16
    %v1476 = vpop.permute.xlu0 %1475
    %1477 = vrot.lane.b32.xlu0 %v1235, 16
    %v1478 = vpop.permute.xlu0 %1477
    %1483 = vrot.lane.b32.xlu0 %v1412, 24
    %v1484 = vpop.permute.xlu0 %1483
    %1485 = vrot.lane.b32.xlu0 %v1460, 24
    %v1486 = vpop.permute.xlu0 %1485
    %v1489 = vsel %vm569, %v737, %v1468
    %v1490 = vsel %vm569, %v785, %v1470
    %v1491 = vsel %vm162, %v1489, %v1476
    %v1492 = vsel %vm162, %v1490, %v1478
    %vm1493 = vcmask 195584
    %v1494 = vsel %vm1493, %v1491, %v1484
    %v1495 = vsel %vm1493, %v1492, %v1486
    %v1496 = vpack.c.bf16 %v1495, %v1494
    %v1497 = vld [vmem:[#allocation14] sm:$0xf]
    %v1498 = vld [vmem:[#allocation14 + $0x4] sm:$0xf]
    %v1499 = vld [vmem:[#allocation14 + $0x8] sm:$0xf]
    %v1500 = vld [vmem:[#allocation14 + $0xc] sm:$0xf]
    %v1505 = vunpack.c.l.b16 %v1497
    %v1506 = vunpack.c.l.b16 %v1498
    %v1507 = vunpack.c.l.b16 %v1499
    %v1508 = vunpack.c.l.b16 %v1500
    %v1509 = vpack.c.b16 %v1506, %v1505
    %v1510 = vpack.c.b16 %v1508, %v1507
    %v1514 = vsel %vm433, %v1496, 0
    %1516 = vmatprep.subr.bf16.mxu0 0
    %1517 = vmatpush1.bf16.msra.mxu0 0
    %1518 = vmatprep.subr.bf16.mxu0 0
    %1519 = vmatpush1.bf16.msra.mxu0 0
    %1520 = vmatprep.subr.bf16.mxu0 0
    %1521 = vmatpush1.bf16.msra.mxu0 0
    %1522 = vmatprep.subr.bf16.mxu0 0
    %1523 = vmatpush1.bf16.msra.mxu0 0
    %1524 = vmatprep.subr.bf16.mxu0 0
    %1525 = vmatpush1.bf16.msra.mxu0 0
    %1526 = vmatprep.subr.bf16.mxu0 0
    %1527 = vmatpush1.bf16.msra.mxu0 0
    %1528 = vmatprep.subr.bf16.mxu0 0
    %1529 = vmatpush1.bf16.msra.mxu0 %v1510
    %1530 = vmatprep.subr.bf16.mxu0 0
    %1531 = vmatpush1.bf16.msra.mxu0 %v1509
    %1532 = vmatprep.subr.bf16.mxu0 0
    %1533 = vmatpush2.bf16.msra.mxu0 0
    %1534 = vmatprep.subr.bf16.mxu0 0
    %1535 = vmatpush2.bf16.msra.mxu0 0
    %1536 = vmatprep.subr.bf16.mxu0 0
    %1537 = vmatpush2.bf16.msra.mxu0 0
    %1538 = vmatprep.subr.bf16.mxu0 0
    %1539 = vmatpush2.bf16.msra.mxu0 0
    %1540 = vmatprep.subr.bf16.mxu0 0
    %1541 = vmatpush2.bf16.msra.mxu0 0
    %1542 = vmatprep.subr.bf16.mxu0 0
    %1543 = vmatpush2.bf16.msra.mxu0 0
    %1544 = vmatprep.subr.bf16.mxu0 0
    %1545 = vmatpush2.bf16.msra.mxu0 0
    %1546 = vmatprep.subr.bf16.mxu0 0
    %1547 = vmatpush2.bf16.msra.mxu0 0
    %1548 = vmatprep.mubr.bf16.mxu0 0
    %1549 = vmatmul.mubr.bf16.gmra.mxu0 %v1514
    %v1550 = vpop.f32.mrf.mxu0
    %v1551 = vadd.f32 0.0, %v1550
    %v1552 = vpop.f32.mrf.mxu0
    %v1553 = vpop.f32.mrf.mxu0
    %v1554 = vadd.f32 0.0, %v1553
    %v1555 = vpop.f32.mrf.mxu0
    %1556 = vdwg.mxu0
    %v1557 = vpack.c.bf16 %v494, %v493
    %v1558 = vld [vmem:[#allocation16] sm:$0xf]
    %v1559 = vld [vmem:[#allocation16 + $0x4] sm:$0xf]
    %v1560 = vld [vmem:[#allocation16 + $0x8] sm:$0xf]
    %v1561 = vld [vmem:[#allocation16 + $0xc] sm:$0xf]
    %v1566 = vunpack.c.l.b16 %v1558
    %v1567 = vunpack.c.l.b16 %v1559
    %v1568 = vunpack.c.l.b16 %v1560
    %v1569 = vunpack.c.l.b16 %v1561
    %v1570 = vpack.c.b16 %v1567, %v1566
    %v1571 = vpack.c.b16 %v1569, %v1568
    %v1575 = vsel %vm433, %v1557, 0
    %1577 = vmatprep.subr.bf16.mxu0 0
    %1578 = vmatpush1.bf16.msra.mxu0 0
    %1579 = vmatprep.subr.bf16.mxu0 0
    %1580 = vmatpush1.bf16.msra.mxu0 0
    %1581 = vmatprep.subr.bf16.mxu0 0
    %1582 = vmatpush1.bf16.msra.mxu0 0
    %1583 = vmatprep.subr.bf16.mxu0 0
    %1584 = vmatpush1.bf16.msra.mxu0 0
    %1585 = vmatprep.subr.bf16.mxu0 0
    %1586 = vmatpush1.bf16.msra.mxu0 0
    %1587 = vmatprep.subr.bf16.mxu0 0
    %1588 = vmatpush1.bf16.msra.mxu0 0
    %1589 = vmatprep.subr.bf16.mxu0 0
    %1590 = vmatpush1.bf16.msra.mxu0 %v1571
    %1591 = vmatprep.subr.bf16.mxu0 0
    %1592 = vmatpush1.bf16.msra.mxu0 %v1570
    %1593 = vmatprep.subr.bf16.mxu0 0
    %1594 = vmatpush2.bf16.msra.mxu0 0
    %1595 = vmatprep.subr.bf16.mxu0 0
    %1596 = vmatpush2.bf16.msra.mxu0 0
    %1597 = vmatprep.subr.bf16.mxu0 0
    %1598 = vmatpush2.bf16.msra.mxu0 0
    %1599 = vmatprep.subr.bf16.mxu0 0
    %1600 = vmatpush2.bf16.msra.mxu0 0
    %1601 = vmatprep.subr.bf16.mxu0 0
    %1602 = vmatpush2.bf16.msra.mxu0 0
    %1603 = vmatprep.subr.bf16.mxu0 0
    %1604 = vmatpush2.bf16.msra.mxu0 0
    %1605 = vmatprep.subr.bf16.mxu0 0
    %1606 = vmatpush2.bf16.msra.mxu0 0
    %1607 = vmatprep.subr.bf16.mxu0 0
    %1608 = vmatpush2.bf16.msra.mxu0 0
    %1609 = vmatprep.mubr.bf16.mxu0 0
    %1610 = vmatmul.mubr.bf16.gmra.mxu0 %v1575
    %v1611 = vpop.f32.mrf.mxu0
    %v1612 = vadd.f32 0.0, %v1611
    %v1613 = vpop.f32.mrf.mxu0
    %v1614 = vpop.f32.mrf.mxu0
    %v1615 = vadd.f32 0.0, %v1614
    %v1616 = vpop.f32.mrf.mxu0
    %1617 = vdwg.mxu0
    %v1618 = vmul.f32 %v1612, 0.5
    %v1619 = vmul.f32 %v1615, 0.5
    %v1620 = vmul.f32 %v1612, 0.70710677
    %v1621 = vmul.f32 %v1615, 0.70710677
    %vm1622 = vcmp.ge.f32.partialorder %v1620, 0.0
    %vm1623 = vcmp.ge.f32.partialorder %v1621, 0.0
    %v1624 = vsel %vm1622, 1.0, -1.0
    %v1625 = vsel %vm1623, 1.0, -1.0
    %v1626 = vand.u32 2147483647, %v1620
    %v1627 = vand.u32 2147483647, %v1621
    %v1628 = vmul.f32 %v1626, 0.3275911
    %v1629 = vmul.f32 %v1627, 0.3275911
    %v1630 = vadd.f32 %v1628, 1.0
    %v1631 = vadd.f32 %v1629, 1.0
    %v1632 = vrcp.pop %v1630
    %v1633 = vmul.f32 1.0, %v1632
    %v1634 = vrcp.pop %v1631
    %v1635 = vmul.f32 1.0, %v1634
    %v1636 = vmul.f32 %v1633, 1.0614054
    %v1637 = vmul.f32 %v1635, 1.0614054
    %v1638 = vadd.f32 %v1636, -1.4531521
    %v1639 = vadd.f32 %v1637, -1.4531521
    %v1640 = vmul.f32 %v1638, %v1633
    %v1641 = vmul.f32 %v1639, %v1635
    %v1642 = vadd.f32 %v1640, 1.4214138
    %v1643 = vadd.f32 %v1641, 1.4214138
    %v1644 = vmul.f32 %v1642, %v1633
    %v1645 = vmul.f32 %v1643, %v1635
    %v1646 = vadd.f32 %v1644, -0.28449672
    %v1647 = vadd.f32 %v1645, -0.28449672
    %v1648 = vmul.f32 %v1646, %v1633
    %v1649 = vmul.f32 %v1647, %v1635
    %v1650 = vadd.f32 %v1648, 0.2548296
    %v1651 = vadd.f32 %v1649, 0.2548296
    %v1652 = vmul.f32 %v1650, %v1633
    %v1653 = vmul.f32 %v1651, %v1635
    %v1654 = vsub.f32 0.0, %v1626
    %v1655 = vsub.f32 0.0, %v1627
    %v1656 = vmul.f32 %v1654, %v1626
    %v1657 = vmul.f32 %v1655, %v1627
    %v1658 = vmul.f32 %v1656, 1.442695
    %v1659 = vpow.pop %v1658
    %v1660 = vmul.f32 %v1657, 1.442695
    %v1661 = vpow.pop %v1660
    %v1662 = vmul.f32 %v1652, %v1659
    %v1663 = vmul.f32 %v1653, %v1661
    %v1664 = vsub.f32 1.0, %v1662
    %v1665 = vsub.f32 1.0, %v1663
    %v1666 = vmul.f32 %v1624, %v1664
    %v1667 = vmul.f32 %v1625, %v1665
    %v1668 = vadd.f32 %v1666, 1.0
    %v1669 = vadd.f32 %v1667, 1.0
    %v1670 = vmul.f32 %v1618, %v1668
    %v1671 = vmul.f32 %v1619, %v1669
    %v1672 = vpack.c.bf16 %v1671, %v1670
    %v1673 = vld [vmem:[%s9] sm:$0xf]
    %v1674 = vld [vmem:[%s9 + $0x4] sm:$0xf]
    %v1675 = vld [vmem:[%s9 + $0x8] sm:$0xf]
    %v1676 = vld [vmem:[%s9 + $0xc] sm:$0xf]
    %v1681 = vunpack.c.l.b16 %v1673
    %v1682 = vunpack.c.l.b16 %v1674
    %v1683 = vunpack.c.l.b16 %v1675
    %v1684 = vunpack.c.l.b16 %v1676
    %v1685 = vpack.c.b16 %v1682, %v1681
    %v1686 = vpack.c.b16 %v1684, %v1683
    %v1690 = vsel %vm433, %v1672, 0
    %1692 = vmatprep.subr.bf16.mxu0 0
    %1693 = vmatpush1.bf16.msra.mxu0 0
    %1694 = vmatprep.subr.bf16.mxu0 0
    %1695 = vmatpush1.bf16.msra.mxu0 0
    %1696 = vmatprep.subr.bf16.mxu0 0
    %1697 = vmatpush1.bf16.msra.mxu0 0
    %1698 = vmatprep.subr.bf16.mxu0 0
    %1699 = vmatpush1.bf16.msra.mxu0 0
    %1700 = vmatprep.subr.bf16.mxu0 0
    %1701 = vmatpush1.bf16.msra.mxu0 0
    %1702 = vmatprep.subr.bf16.mxu0 0
    %1703 = vmatpush1.bf16.msra.mxu0 0
    %1704 = vmatprep.subr.bf16.mxu0 0
    %1705 = vmatpush1.bf16.msra.mxu0 %v1686
    %1706 = vmatprep.subr.bf16.mxu0 0
    %1707 = vmatpush1.bf16.msra.mxu0 %v1685
    %1708 = vmatprep.subr.bf16.mxu0 0
    %1709 = vmatpush2.bf16.msra.mxu0 0
    %1710 = vmatprep.subr.bf16.mxu0 0
    %1711 = vmatpush2.bf16.msra.mxu0 0
    %1712 = vmatprep.subr.bf16.mxu0 0
    %1713 = vmatpush2.bf16.msra.mxu0 0
    %1714 = vmatprep.subr.bf16.mxu0 0
    %1715 = vmatpush2.bf16.msra.mxu0 0
    %1716 = vmatprep.subr.bf16.mxu0 0
    %1717 = vmatpush2.bf16.msra.mxu0 0
    %1718 = vmatprep.subr.bf16.mxu0 0
    %1719 = vmatpush2.bf16.msra.mxu0 0
    %1720 = vmatprep.subr.bf16.mxu0 0
    %1721 = vmatpush2.bf16.msra.mxu0 0
    %1722 = vmatprep.subr.bf16.mxu0 0
    %1723 = vmatpush2.bf16.msra.mxu0 0
    %1724 = vmatprep.mubr.bf16.mxu0 0
    %1725 = vmatmul.mubr.bf16.gmra.mxu0 %v1690
    %v1726 = vpop.f32.mrf.mxu0
    %v1727 = vadd.f32 %v1551, %v1726
    %v1728 = vpop.f32.mrf.mxu0
    %v1729 = vpop.f32.mrf.mxu0
    %v1730 = vadd.f32 %v1554, %v1729
    %v1731 = vpop.f32.mrf.mxu0
    %1732 = vdwg.mxu0
    %v1733 = vadd.f32 %v1727, %v429
    %v1734 = vadd.f32 %v1730, %v430
    %1735 = vst.msk [vmem:[#allocation17] sm:$0xff] %vm433, %v1733
    %1736 = vst.msk [vmem:[#allocation17 + $0x8] sm:$0xff] %vm433, %v1734
    // Predicated region
    $region78: #{tpu_custom_call.1} parent=1 // pred_check
      _
    $region79: #{tpu_custom_call.1} parent=1 // pred_check_branch
      %1738 = sbr.rel (0) target = $region81
    $region80: #{tpu_custom_call.1} parent=1 // pred_region
      %s1740 = ssub.s32 256, 256
      %1741 = vsyncadd [#allocation4], %s1740
      %s1742 = sshll.u32 [#allocation17], 4
      %s1743 = int_to_ptr.vmem [resolvable:$true] %s1742
      %1748 = dma.vmem_to_hbm [thread:$0]  %s1743, 256, %s10, [#allocation4], 128, 128, 8
    $region81: #{tpu_custom_call.1} parent=1 // pred_fallthru
      _
    // Predicated region
    $region82: #{tpu_custom_call.1} parent=1 // pred_check
      _
    $region83: #{tpu_custom_call.1} parent=1 // pred_check_branch
      %1750 = sbr.rel (0) target = $region85
    $region84: #{tpu_custom_call.1} parent=1 // pred_region
      %1751 = dma.done [#allocation4], 256
    $region85: #{tpu_custom_call.1} parent=1 // pred_fallthru
      _
    %1752 = vsyncpa [#allocation3], 1
    %1753 = vsyncpa [#allocation6], 1
    %1754 = vsyncpa [#allocation9], 1
    %1755 = vsyncpa [#allocation12], 1
    %1756 = vsyncpa [#allocation15], 1
    %1757 = vsyncpa [#allocation4], 1

</llo_original>
